<compile_context>
chip_gen: v7x
topology: tpu7x:2x2x1
jax: 0.10.0
libtpu: 0.0.40
codegen_flags: <defaults>
</compile_context>

<pallas_src>
import jax
import jax.numpy as jnp
from jax.experimental import pallas as pl
from jax.experimental.pallas import tpu as pltpu


# For the 3x3 conv in width-folded coordinates: output column q = 2b + dq reads
# input column q - 1 + kj = 2*(b + c0 - 1) + dj, i.e. tap kj of parity dq reads
# folded-column offset c0 (into the padded buffer) and column-parity dj.
_COL_HALF = (
    ((0, 1), (1, 0), (1, 1)),   # dq = 0 : kj -> (c0, dj)
    ((1, 0), (1, 1), (2, 0)),   # dq = 1
)


def _decoder_fused_kernel(x1_ref, x2f_ref, wt_ref, bt_ref, wc_ref, bc_ref, o_ref):
    """One batch element per grid step.

    x1_ref : (1, H, W, Cin)     bf16  low-res input (NHWC)
    x2f_ref: (1, 2H, W, 2*C2)   bf16  width-folded skip connection
    wt_ref : (Cin, 4*Co)        bf16  ConvTranspose2d weight, cols (di, dj, co)
    bt_ref : (1, 4*Co)          f32   ConvTranspose2d bias, tiled x4
    wc_ref : (18*Cmid, 2*Co)    bf16  folded 3x3-conv weight (both parities)
    bc_ref : (1, 2*Co)          f32   Conv2d bias, tiled x2
    o_ref  : (1, 2H*W, 2*Co)    f32   width-folded output
    """
    _, H, W, Cin = x1_ref.shape
    twoH = 2 * H
    co2 = wt_ref.shape[1] // 2          # folded up-channel width  (= 2*Co)
    c22 = x2f_ref.shape[3]              # folded skip-channel width (= 2*C2)

    # ---- ConvTranspose2d(k=2, s=2): a single MXU matmul over x1 pixels ------
    x1_flat = x1_ref[0].reshape(H * W, Cin)
    up = jnp.dot(x1_flat, wt_ref[...], preferred_element_type=jnp.float32)
    up = (up + bt_ref[...]).astype(jnp.bfloat16)        # (H*W, 4*Co)

    # Row interleave / width fold: uf[2i+di, j, dj*Co+co] = up_img[2i+di, 2j+dj, co]
    r0 = up[:, :co2].reshape(H, W, co2)[:, None]        # rows 2i   (di = 0)
    r1 = up[:, co2:].reshape(H, W, co2)[:, None]        # rows 2i+1 (di = 1)
    uf = jnp.concatenate([r0, r1], axis=1).reshape(twoH, W, co2)

    # ---- fused zero-pad (rows + folded columns), built as VMEM values -------
    def pad1(img, cw):
        zc = jnp.zeros((twoH, 1, cw), jnp.bfloat16)
        zr = jnp.zeros((1, W + 2, cw), jnp.bfloat16)
        return jnp.concatenate(
            [zr, jnp.concatenate([zc, img, zc], axis=1), zr], axis=0)

    up_pad = pad1(uf, co2)                              # (2H+2, W+2, 2*Co)
    x2_pad = pad1(x2f_ref[0], c22)                      # (2H+2, W+2, 2*C2)

    # ---- Conv2d(3x3, pad=1) + ReLU: one folded im2col, ONE fat matmul -------
    pieces = []
    for ki in range(3):                 # static unroll over row taps
        for c0 in range(3):             # static unroll over folded column offsets
            pieces.append(up_pad[ki:ki + twoH, c0:c0 + W, :])
            pieces.append(x2_pad[ki:ki + twoH, c0:c0 + W, :])
    patches = jnp.concatenate(pieces, axis=-1)          # (2H, W, 18*Cmid)
    patches = patches.reshape(twoH * W, patches.shape[-1])

    out = jnp.dot(patches, wc_ref[...], preferred_element_type=jnp.float32)
    out = out + bc_ref[...]                             # (2H*W, 2*Co)
    o_ref[0] = jnp.maximum(out, 0.0).astype(o_ref.dtype)


def _fold_conv_weights(w_c, co, c2):
    """Per-parity (dq) weight slabs matching the kernel's patch channel order:
    (ki, c0, [up|x2], dj, channel).  A (c0, dj) slot gets Wc[:, :, ki, kj] iff
    tap kj of parity dq reads it, else zero."""
    co_out = w_c.shape[0]
    srcs = (w_c[:, :co, :, :], w_c[:, co:, :, :])       # up slab, skip slab
    slabs = []
    for dq in range(2):
        rows = []
        for ki in range(3):
            for c0 in range(3):
                for w_src in srcs:
                    csrc = w_src.shape[1]
                    for dj in range(2):
                        blk = jnp.zeros((csrc, co_out), jnp.float32)
                        for kj in range(3):
                            if _COL_HALF[dq][kj] == (c0, dj):
                                blk = w_src[:, :, ki, kj].T.astype(jnp.float32)
                        rows.append(blk)
        slabs.append(jnp.concatenate(rows, axis=0))
    # Fuse both parities column-wise -> one (18*Cmid, 2*Co_out) matmul RHS.
    return jnp.concatenate(slabs, axis=1).astype(jnp.bfloat16)


@jax.jit
def decoder_forward(x1_nchw, x2_nchw, params):
    w_t, b_t, w_c, b_c = params
    B, Cin, H, W = x1_nchw.shape
    Co = w_t.shape[1]
    C2 = x2_nchw.shape[1]
    Co_out = w_c.shape[0]
    twoH = 2 * H

    # Boundary layout glue (hoisted across stages in a full UNet).
    x1 = jnp.transpose(x1_nchw, (0, 2, 3, 1)).astype(jnp.bfloat16)     # NHWC
    x2 = jnp.transpose(x2_nchw, (0, 2, 3, 1))                          # NHWC
    x2f = x2.reshape(B, twoH, W, 2 * C2).astype(jnp.bfloat16)          # width-fold (free reshape)

    wt_f = jnp.transpose(w_t, (0, 2, 3, 1)).reshape(Cin, 4 * Co).astype(jnp.bfloat16)
    bt4 = jnp.tile(b_t, 4).reshape(1, 4 * Co).astype(jnp.float32)
    wc = _fold_conv_weights(w_c, Co, C2)                               # (18*Cmid, 2*Co_out)
    bc2 = jnp.tile(b_c, 2).reshape(1, 2 * Co_out).astype(jnp.float32)
    kdim = wc.shape[0]

    outf = pl.pallas_call(
        _decoder_fused_kernel,
        out_shape=jax.ShapeDtypeStruct((B, twoH * W, 2 * Co_out), jnp.float32),
        grid=(B,),
        in_specs=[
            pl.BlockSpec((1, H, W, Cin), lambda b: (b, 0, 0, 0)),
            pl.BlockSpec((1, twoH, W, 2 * C2), lambda b: (b, 0, 0, 0)),
            pl.BlockSpec((Cin, 4 * Co), lambda b: (0, 0)),
            pl.BlockSpec((1, 4 * Co), lambda b: (0, 0)),
            pl.BlockSpec((kdim, 2 * Co_out), lambda b: (0, 0)),
            pl.BlockSpec((1, 2 * Co_out), lambda b: (0, 0)),
        ],
        out_specs=pl.BlockSpec((1, twoH * W, 2 * Co_out), lambda b: (b, 0, 0)),
        compiler_params=pltpu.CompilerParams(dimension_semantics=("parallel",)),
    )(x1, x2f, wt_f, bt4, wc, bc2)

    # Width-unfold is a contiguous (free) reshape; NHWC -> NCHW at the boundary.
    out_nhwc = outf.reshape(B, twoH, 2 * W, Co_out)
    return jnp.transpose(out_nhwc, (0, 3, 1, 2))


# Pure-JAX reference (f32) for validation.
def decoder_ref(x1, x2, params):
    w_t, b_t, w_c, b_c = params
    B, Cin, H, W = x1.shape
    Co = w_t.shape[1]
    t = jnp.einsum('ncij,cokl->noikjl', x1, w_t)          # (B,Co,H,2,W,2)
    up = t.reshape(B, Co, 2 * H, 2 * W) + b_t[None, :, None, None]
    cat = jnp.concatenate([up, x2], axis=1)
    out = jax.lax.conv_general_dilated(
        cat, w_c, (1, 1), 'SAME',
        dimension_numbers=('NCHW', 'OIHW', 'NCHW'))
    return jnp.maximum(out + b_c[None, :, None, None], 0.0)


if __name__ == "__main__":
    # in_channels=8, out_channels=4, skip channels=4 -> middle_channels=8.
    B, Cin, Co, C2 = 2, 8, 4, 4
    Cmid = Co + C2
    H = W = 8                                   # x1 spatial; x2 is 2H x 2W

    key = jax.random.PRNGKey(0)
    k1, k2, k3, k4, k5, k6 = jax.random.split(key, 6)

    x1 = jax.random.normal(k1, (B, Cin, H, W), jnp.float32)
    x2 = jax.random.normal(k2, (B, C2, 2 * H, 2 * W), jnp.float32)

    w_t = 0.1 * jax.random.normal(k3, (Cin, Co, 2, 2), jnp.float32)   # ConvTranspose2d.weight
    b_t = 0.1 * jax.random.normal(k4, (Co,), jnp.float32)             # ConvTranspose2d.bias
    w_c = 0.1 * jax.random.normal(k5, (Co, Cmid, 3, 3), jnp.float32)  # Conv2d.weight
    b_c = 0.1 * jax.random.normal(k6, (Co,), jnp.float32)             # Conv2d.bias
    params = (w_t, b_t, w_c, b_c)

    out = jax.block_until_ready(decoder_forward(x1, x2, params))
    ref = jax.block_until_ready(decoder_ref(x1, x2, params))

    assert out.shape == (B, Co, 2 * H, 2 * W), out.shape
    err = float(jnp.max(jnp.abs(out - ref)))
    # bf16 matmul operands with f32 accumulation -> loose-ish tolerance.
    assert err < 2e-2, err
    print("KERNEL_OK")
</pallas_src>

<mosaic_0001>
module attributes {stable_mosaic.version = 11 : i64} {
  func.func @_decoder_fused_kernel(%arg0: i32, %arg1: memref<1x8x8x8xbf16, #tpu.memory_space<vmem>>, %arg2: memref<1x16x8x8xbf16, #tpu.memory_space<vmem>>, %arg3: memref<8x16xbf16, #tpu.memory_space<vmem>>, %arg4: memref<1x16xf32, #tpu.memory_space<vmem>>, %arg5: memref<144x8xbf16, #tpu.memory_space<vmem>>, %arg6: memref<1x8xf32, #tpu.memory_space<vmem>>, %arg7: memref<1x128x8xf32, #tpu.memory_space<vmem>>) attributes {dimension_semantics = [#tpu.dimension_semantics<parallel>], iteration_bounds = array<i64: 2>, scalar_prefetch = 0 : i64, scratch_operands = 0 : i64, tpu.core_type = #tpu.core_type<tc>, window_params = [{transform_indices = @transform_0, window_bounds = array<i64: 1, 8, 8, 8>}, {transform_indices = @transform_1, window_bounds = array<i64: 1, 16, 8, 8>}, {pipeline_mode = #tpu.pipeline_mode<synchronous>, transform_indices = @transform_2, window_bounds = array<i64: 8, 16>}, {pipeline_mode = #tpu.pipeline_mode<synchronous>, transform_indices = @transform_3, window_bounds = array<i64: 1, 16>}, {pipeline_mode = #tpu.pipeline_mode<synchronous>, transform_indices = @transform_4, window_bounds = array<i64: 144, 8>}, {pipeline_mode = #tpu.pipeline_mode<synchronous>, transform_indices = @transform_5, window_bounds = array<i64: 1, 8>}, {transform_indices = @transform_6, window_bounds = array<i64: 1, 128, 8>}]} {
    %c0 = arith.constant 0 : index
    %c0_0 = arith.constant 0 : index
    %c0_1 = arith.constant 0 : index
    %c0_2 = arith.constant 0 : index
    %0 = vector.load %arg1[%c0, %c0_0, %c0_1, %c0_2] : memref<1x8x8x8xbf16, #tpu.memory_space<vmem>>, vector<1x8x8x8xbf16>
    %1 = vector.shape_cast %0 : vector<1x8x8x8xbf16> to vector<8x8x8xbf16>
    %2 = vector.shape_cast %1 : vector<8x8x8xbf16> to vector<64x8xbf16>
    %c0_3 = arith.constant 0 : index
    %c0_4 = arith.constant 0 : index
    %3 = vector.load %arg3[%c0_3, %c0_4] : memref<8x16xbf16, #tpu.memory_space<vmem>>, vector<8x16xbf16>
    %cst = arith.constant dense<0.000000e+00> : vector<64x16xf32>
    %4 = tpu.matmul %2, %3, %cst {dimension_numbers = #tpu.dot_dimension_numbers<[1], [0], [0], [1], [0, 0, 1, 1], [], []>} : vector<64x8xbf16>, vector<8x16xbf16>, vector<64x16xf32> -> vector<64x16xf32>
    %c0_5 = arith.constant 0 : index
    %c0_6 = arith.constant 0 : index
    %5 = vector.load %arg4[%c0_5, %c0_6] : memref<1x16xf32, #tpu.memory_space<vmem>>, vector<1x16xf32>
    %6 = vector.broadcast %5 : vector<1x16xf32> to vector<64x16xf32>
    %7 = arith.addf %4, %6 : vector<64x16xf32>
    %8 = arith.truncf %7 : vector<64x16xf32> to vector<64x16xbf16>
    %9 = vector.extract_strided_slice %8 {offsets = [0, 0], sizes = [64, 8], strides = [1, 1]} : vector<64x16xbf16> to vector<64x8xbf16>
    %10 = vector.shape_cast %9 : vector<64x8xbf16> to vector<8x8x8xbf16>
    %11 = vector.shape_cast %10 : vector<8x8x8xbf16> to vector<8x1x8x8xbf16>
    %12 = vector.extract_strided_slice %8 {offsets = [0, 8], sizes = [64, 8], strides = [1, 1]} : vector<64x16xbf16> to vector<64x8xbf16>
    %13 = vector.shape_cast %12 : vector<64x8xbf16> to vector<8x8x8xbf16>
    %14 = vector.shape_cast %13 : vector<8x8x8xbf16> to vector<8x1x8x8xbf16>
    %15 = tpu.concatenate %11, %14 in 1 : vector<8x1x8x8xbf16>, vector<8x1x8x8xbf16> -> vector<8x2x8x8xbf16>
    %16 = vector.shape_cast %15 : vector<8x2x8x8xbf16> to vector<16x8x8xbf16>
    %cst_7 = arith.constant 0.000000e+00 : bf16
    %17 = vector.broadcast %cst_7 : bf16 to vector<16x1x8xbf16>
    %cst_8 = arith.constant 0.000000e+00 : bf16
    %18 = vector.broadcast %cst_8 : bf16 to vector<1x10x8xbf16>
    %19 = tpu.concatenate %17, %16, %17 in 1 : vector<16x1x8xbf16>, vector<16x8x8xbf16>, vector<16x1x8xbf16> -> vector<16x10x8xbf16>
    %20 = tpu.concatenate %18, %19, %18 in 0 : vector<1x10x8xbf16>, vector<16x10x8xbf16>, vector<1x10x8xbf16> -> vector<18x10x8xbf16>
    %c0_9 = arith.constant 0 : index
    %c0_10 = arith.constant 0 : index
    %c0_11 = arith.constant 0 : index
    %c0_12 = arith.constant 0 : index
    %21 = vector.load %arg2[%c0_9, %c0_10, %c0_11, %c0_12] : memref<1x16x8x8xbf16, #tpu.memory_space<vmem>>, vector<1x16x8x8xbf16>
    %22 = vector.shape_cast %21 : vector<1x16x8x8xbf16> to vector<16x8x8xbf16>
    %cst_13 = arith.constant 0.000000e+00 : bf16
    %23 = vector.broadcast %cst_13 : bf16 to vector<16x1x8xbf16>
    %cst_14 = arith.constant 0.000000e+00 : bf16
    %24 = vector.broadcast %cst_14 : bf16 to vector<1x10x8xbf16>
    %25 = tpu.concatenate %23, %22, %23 in 1 : vector<16x1x8xbf16>, vector<16x8x8xbf16>, vector<16x1x8xbf16> -> vector<16x10x8xbf16>
    %26 = tpu.concatenate %24, %25, %24 in 0 : vector<1x10x8xbf16>, vector<16x10x8xbf16>, vector<1x10x8xbf16> -> vector<18x10x8xbf16>
    %27 = vector.extract_strided_slice %20 {offsets = [0, 0, 0], sizes = [16, 8, 8], strides = [1, 1, 1]} : vector<18x10x8xbf16> to vector<16x8x8xbf16>
    %28 = vector.extract_strided_slice %26 {offsets = [0, 0, 0], sizes = [16, 8, 8], strides = [1, 1, 1]} : vector<18x10x8xbf16> to vector<16x8x8xbf16>
    %29 = vector.extract_strided_slice %20 {offsets = [0, 1, 0], sizes = [16, 8, 8], strides = [1, 1, 1]} : vector<18x10x8xbf16> to vector<16x8x8xbf16>
    %30 = vector.extract_strided_slice %26 {offsets = [0, 1, 0], sizes = [16, 8, 8], strides = [1, 1, 1]} : vector<18x10x8xbf16> to vector<16x8x8xbf16>
    %31 = vector.extract_strided_slice %20 {offsets = [0, 2, 0], sizes = [16, 8, 8], strides = [1, 1, 1]} : vector<18x10x8xbf16> to vector<16x8x8xbf16>
    %32 = vector.extract_strided_slice %26 {offsets = [0, 2, 0], sizes = [16, 8, 8], strides = [1, 1, 1]} : vector<18x10x8xbf16> to vector<16x8x8xbf16>
    %33 = vector.extract_strided_slice %20 {offsets = [1, 0, 0], sizes = [16, 8, 8], strides = [1, 1, 1]} : vector<18x10x8xbf16> to vector<16x8x8xbf16>
    %34 = vector.extract_strided_slice %26 {offsets = [1, 0, 0], sizes = [16, 8, 8], strides = [1, 1, 1]} : vector<18x10x8xbf16> to vector<16x8x8xbf16>
    %35 = vector.extract_strided_slice %20 {offsets = [1, 1, 0], sizes = [16, 8, 8], strides = [1, 1, 1]} : vector<18x10x8xbf16> to vector<16x8x8xbf16>
    %36 = vector.extract_strided_slice %26 {offsets = [1, 1, 0], sizes = [16, 8, 8], strides = [1, 1, 1]} : vector<18x10x8xbf16> to vector<16x8x8xbf16>
    %37 = vector.extract_strided_slice %20 {offsets = [1, 2, 0], sizes = [16, 8, 8], strides = [1, 1, 1]} : vector<18x10x8xbf16> to vector<16x8x8xbf16>
    %38 = vector.extract_strided_slice %26 {offsets = [1, 2, 0], sizes = [16, 8, 8], strides = [1, 1, 1]} : vector<18x10x8xbf16> to vector<16x8x8xbf16>
    %39 = vector.extract_strided_slice %20 {offsets = [2, 0, 0], sizes = [16, 8, 8], strides = [1, 1, 1]} : vector<18x10x8xbf16> to vector<16x8x8xbf16>
    %40 = vector.extract_strided_slice %26 {offsets = [2, 0, 0], sizes = [16, 8, 8], strides = [1, 1, 1]} : vector<18x10x8xbf16> to vector<16x8x8xbf16>
    %41 = vector.extract_strided_slice %20 {offsets = [2, 1, 0], sizes = [16, 8, 8], strides = [1, 1, 1]} : vector<18x10x8xbf16> to vector<16x8x8xbf16>
    %42 = vector.extract_strided_slice %26 {offsets = [2, 1, 0], sizes = [16, 8, 8], strides = [1, 1, 1]} : vector<18x10x8xbf16> to vector<16x8x8xbf16>
    %43 = vector.extract_strided_slice %20 {offsets = [2, 2, 0], sizes = [16, 8, 8], strides = [1, 1, 1]} : vector<18x10x8xbf16> to vector<16x8x8xbf16>
    %44 = vector.extract_strided_slice %26 {offsets = [2, 2, 0], sizes = [16, 8, 8], strides = [1, 1, 1]} : vector<18x10x8xbf16> to vector<16x8x8xbf16>
    %45 = tpu.concatenate %27, %28, %29, %30, %31, %32, %33, %34, %35, %36, %37, %38, %39, %40, %41, %42 in 2 : vector<16x8x8xbf16>, vector<16x8x8xbf16>, vector<16x8x8xbf16>, vector<16x8x8xbf16>, vector<16x8x8xbf16>, vector<16x8x8xbf16>, vector<16x8x8xbf16>, vector<16x8x8xbf16>, vector<16x8x8xbf16>, vector<16x8x8xbf16>, vector<16x8x8xbf16>, vector<16x8x8xbf16>, vector<16x8x8xbf16>, vector<16x8x8xbf16>, vector<16x8x8xbf16>, vector<16x8x8xbf16> -> vector<16x8x128xbf16>
    %46 = tpu.concatenate %43, %44 in 2 : vector<16x8x8xbf16>, vector<16x8x8xbf16> -> vector<16x8x16xbf16>
    %47 = tpu.concatenate %45, %46 in 2 : vector<16x8x128xbf16>, vector<16x8x16xbf16> -> vector<16x8x144xbf16>
    %48 = vector.shape_cast %47 : vector<16x8x144xbf16> to vector<128x144xbf16>
    %c0_15 = arith.constant 0 : index
    %c0_16 = arith.constant 0 : index
    %49 = vector.load %arg5[%c0_15, %c0_16] : memref<144x8xbf16, #tpu.memory_space<vmem>>, vector<144x8xbf16>
    %cst_17 = arith.constant dense<0.000000e+00> : vector<128x8xf32>
    %50 = tpu.matmul %48, %49, %cst_17 {dimension_numbers = #tpu.dot_dimension_numbers<[1], [0], [0], [1], [0, 0, 1, 1], [], []>} : vector<128x144xbf16>, vector<144x8xbf16>, vector<128x8xf32> -> vector<128x8xf32>
    %c0_18 = arith.constant 0 : index
    %c0_19 = arith.constant 0 : index
    %51 = vector.load %arg6[%c0_18, %c0_19] : memref<1x8xf32, #tpu.memory_space<vmem>>, vector<1x8xf32>
    %52 = vector.broadcast %51 : vector<1x8xf32> to vector<128x8xf32>
    %53 = arith.addf %50, %52 : vector<128x8xf32>
    %cst_20 = arith.constant 0.000000e+00 : f32
    %54 = vector.broadcast %cst_20 : f32 to vector<128x8xf32>
    %55 = arith.maximumf %53, %54 : vector<128x8xf32>
    %c0_21 = arith.constant 0 : index
    %c0_22 = arith.constant 0 : index
    %c0_23 = arith.constant 0 : index
    %56 = vector.load %arg7[%c0_21, %c0_22, %c0_23] : memref<1x128x8xf32, #tpu.memory_space<vmem>>, vector<1x128x8xf32>
    %57 = vector.shape_cast %56 : vector<1x128x8xf32> to vector<128x8xf32>
    %58 = vector.shape_cast %55 : vector<128x8xf32> to vector<1x128x8xf32>
    tpu.vector_store %arg7[%c0_21, %c0_22, %c0_23], %58 {strides = array<i32>} : memref<1x128x8xf32, #tpu.memory_space<vmem>>, vector<1x128x8xf32>,
    return
  }
  func.func @transform_0(%arg0: i32) -> (i32, i32, i32, i32) {
    %c0_i32 = arith.constant 0 : i32
    %c0_i32_0 = arith.constant 0 : i32
    %c0_i32_1 = arith.constant 0 : i32
    %c0_i32_2 = arith.constant 0 : i32
    return %arg0, %c0_i32, %c0_i32_0, %c0_i32_1 : i32, i32, i32, i32
  }
  func.func @transform_1(%arg0: i32) -> (i32, i32, i32, i32) {
    %c0_i32 = arith.constant 0 : i32
    %c0_i32_0 = arith.constant 0 : i32
    %c0_i32_1 = arith.constant 0 : i32
    %c0_i32_2 = arith.constant 0 : i32
    return %arg0, %c0_i32, %c0_i32_0, %c0_i32_1 : i32, i32, i32, i32
  }
  func.func @transform_2(%arg0: i32) -> (i32, i32) {
    %c0_i32 = arith.constant 0 : i32
    %c0_i32_0 = arith.constant 0 : i32
    %c0_i32_1 = arith.constant 0 : i32
    return %c0_i32, %c0_i32_0 : i32, i32
  }
  func.func @transform_3(%arg0: i32) -> (i32, i32) {
    %c0_i32 = arith.constant 0 : i32
    %c0_i32_0 = arith.constant 0 : i32
    %c0_i32_1 = arith.constant 0 : i32
    return %c0_i32, %c0_i32_0 : i32, i32
  }
  func.func @transform_4(%arg0: i32) -> (i32, i32) {
    %c0_i32 = arith.constant 0 : i32
    %c0_i32_0 = arith.constant 0 : i32
    %c0_i32_1 = arith.constant 0 : i32
    return %c0_i32, %c0_i32_0 : i32, i32
  }
  func.func @transform_5(%arg0: i32) -> (i32, i32) {
    %c0_i32 = arith.constant 0 : i32
    %c0_i32_0 = arith.constant 0 : i32
    %c0_i32_1 = arith.constant 0 : i32
    return %c0_i32, %c0_i32_0 : i32, i32
  }
  func.func @transform_6(%arg0: i32) -> (i32, i32, i32) {
    %c0_i32 = arith.constant 0 : i32
    %c0_i32_0 = arith.constant 0 : i32
    %c0_i32_1 = arith.constant 0 : i32
    return %arg0, %c0_i32, %c0_i32_0 : i32, i32, i32
  }
}

</mosaic_0001>

<llo_original>
// kernel: tile.13
$region0: #{tile.13}
  #allocation0 [shape = 's32[1]{0}', space=sflag, size = 0x4, scoped, tag = 'scoped memory for tile.13']
  %s0 = inlined_call_operand.vmem [shape: f32[4], index: 0, kind: input, shape index: {}]
  %s1 = inlined_call_operand.vmem [shape: f32[4,4], index: 1, kind: output, shape index: {}]
  // Predicated region
  $region2: #{tile.13} parent=0 // pred_check
    _
  $region3: #{tile.13} parent=0 // pred_check_branch
    %3 = sbr.rel (0) target = $region5
  $region4: #{tile.13} parent=0 // pred_region
    _
  $region5: #{tile.13} parent=0 // pred_fallthru
    _
  %v4 = vld [vmem:[%s0] ss:$0 sm:$0xff]
  %5 = vst [vmem:[%s1] sm:$0xf] %v4

// kernel: tile.18
$region0: #{tile.18}
  #allocation0 [shape = 's32[1]{0}', space=sflag, size = 0x4, scoped, tag = 'scoped memory for tile.18']
  %s0 = inlined_call_operand.vmem [shape: f32[4], index: 0, kind: input, shape index: {}]
  %s1 = inlined_call_operand.vmem [shape: f32[2,4], index: 1, kind: output, shape index: {}]
  // Predicated region
  $region2: #{tile.18} parent=0 // pred_check
    _
  $region3: #{tile.18} parent=0 // pred_check_branch
    %3 = sbr.rel (0) target = $region5
  $region4: #{tile.18} parent=0 // pred_region
    _
  $region5: #{tile.18} parent=0 // pred_fallthru
    _
  %v4 = vld [vmem:[%s0] ss:$0 sm:$0xff]
  %5 = vst [vmem:[%s1] sm:$0x3] %v4

// kernel: tile.14
$region0: #{tile.14}
  %s0 = inlined_call_operand.vmem [shape: f32[4,4], index: 0, kind: input, shape index: {}]
  %s1 = inlined_call_operand.vmem [shape: f32[1,16], index: 1, kind: output, shape index: {}]
  $region1: #{tile.14} parent=0
    #allocation0 [shape = 'u8[4096]{0}', space=vmem, size = 0x1000, scoped, tag = 'scoped mem for output reshape']
    #allocation1 [shape = 'u8[4096]{0}', space=vmem, size = 0x1000, scoped, tag = 'scoped mem for input reshape']
    %s3 = sshllo.u32 0, 4
    %v4 = vld [vmem:[%s0] sm:%s3]
    %5 = vst [vmem:[#allocation1] sm:%s3] %v4
    %v6 = vld [vmem:[#allocation1] sm:$0x1]
    %vm7 = vcmask 31744
    %8 = vst.msk [vmem:[#allocation0] sm:$0x1] %vm7, %v6
    %s9 = scalar_lea.vmem [#allocation1], 3
    %v10 = vld [vmem:[%s9] sm:$0x1]
    %11 = vrot.lane.b32.xlu0 %v10, 12
    %v12 = vpop.permute.xlu0 %11
    %vm13 = vcmask 130144
    %14 = vst.msk [vmem:[#allocation0] sm:$0x1] %vm13, %v12
    %s15 = scalar_lea.vmem [#allocation1], 2
    %v16 = vld [vmem:[%s15] sm:$0x1]
    %17 = vrot.lane.b32.xlu0 %v16, 8
    %v18 = vpop.permute.xlu0 %17
    %vm19 = vcmask 97344
    %20 = vst.msk [vmem:[#allocation0] sm:$0x1] %vm19, %v18
    %s21 = scalar_lea.vmem [#allocation1], 1
    %v22 = vld [vmem:[%s21] sm:$0x1]
    %23 = vrot.lane.b32.xlu0 %v22, 4
    %v24 = vpop.permute.xlu0 %23
    %vm25 = vcmask 64544
    %26 = vst.msk [vmem:[#allocation0] sm:$0x1] %vm25, %v24
    %s28 = sshllo.u32 0, 1
    %v30 = vld [vmem:[#allocation0] sm:%s28]
    %s31 = sshllo.u32 0, 1
    %32 = vst [vmem:[%s1] sm:%s31] %v30

// kernel: tile.19
$region0: #{tile.19}
  %s0 = inlined_call_operand.vmem [shape: f32[2,4], index: 0, kind: input, shape index: {}]
  %s1 = inlined_call_operand.vmem [shape: f32[1,8], index: 1, kind: output, shape index: {}]
  $region1: #{tile.19} parent=0
    #allocation0 [shape = 'u8[4096]{0}', space=vmem, size = 0x1000, scoped, tag = 'scoped mem for output reshape']
    #allocation1 [shape = 'u8[4096]{0}', space=vmem, size = 0x1000, scoped, tag = 'scoped mem for input reshape']
    %s3 = sshllo.u32 0, 2
    %v4 = vld [vmem:[%s0] sm:%s3]
    %5 = vst [vmem:[#allocation1] sm:%s3] %v4
    %v6 = vld [vmem:[#allocation1] sm:$0x1]
    %vm7 = vcmask 31744
    %8 = vst.msk [vmem:[#allocation0] sm:$0x1] %vm7, %v6
    %s9 = scalar_lea.vmem [#allocation1], 1
    %v10 = vld [vmem:[%s9] sm:$0x1]
    %11 = vrot.lane.b32.xlu0 %v10, 4
    %v12 = vpop.permute.xlu0 %11
    %vm13 = vcmask 64544
    %14 = vst.msk [vmem:[#allocation0] sm:$0x1] %vm13, %v12
    %s16 = sshllo.u32 0, 1
    %v18 = vld [vmem:[#allocation0] sm:%s16]
    %s19 = sshllo.u32 0, 1
    %20 = vst [vmem:[%s1] sm:%s19] %v18

// kernel: decoder_forward.1
$region0: #{decoder_forward.1}
  #allocation0 [shape = 'u32[]', space=smem, size = 0x4, offset = 0x4, fixed_abs, tag = 'smem constant byte address 0x4 - core index']
  #allocation1 [shape = 'u32[144,128]{1,0:T(1,128)}', space=vmem, size = 0x12000, scoped, tag = 'internal scratch']
  %s0 = inlined_call_operand.vmem [shape: bf16[2,8,8,8], index: 0, kind: input, shape index: {}]
  %s1 = inlined_call_operand.vmem [shape: bf16[2,16,8,8], index: 1, kind: input, shape index: {}]
  %s2 = inlined_call_operand.vmem [shape: bf16[8,16], index: 2, kind: input, shape index: {}]
  %s3 = inlined_call_operand.vmem [shape: f32[1,16], index: 3, kind: input, shape index: {}]
  %s4 = inlined_call_operand.vmem [shape: bf16[144,8], index: 4, kind: input, shape index: {}]
  %s5 = inlined_call_operand.vmem [shape: f32[1,8], index: 5, kind: input, shape index: {}]
  %s6 = inlined_call_operand.vmem [shape: f32[2,128,8], index: 6, kind: output, shape index: {}]
  %s7 = sld [smem:[#allocation0]]
  $region57: #{decoder_forward.1} parent=0
    _
  %s9 = ssub.s32 1, %s7
  %s10 = scalar_select 0, %s9, %s7
  loop: start=0, step=1, limit=4
  $region2: #{decoder_forward.1} parent=0 // loop_pre_header
    _
  $region3: #{decoder_forward.1} parent=0 // loop_header
    %s12 = sphi 0, %s16
    %p13 = scmp.ge.s32.totalorder %s12, 4
    %s22 = sphi 0, %s24
    %s25 = sphi 0, %s22
    %s26 = sphi 0, %s25
    %s42 = sphi 0, %s26
    %s48 = sphi 0, %s50
    %s51 = sphi 0, %s48
    %s52 = sphi 0, %s51
    %s68 = sphi 0, %s52
    %s72 = sphi 0, %s72
    %s74 = sphi 0, %s72
    %s75 = sphi 0, %s74
    %s89 = sphi 0, %s75
    %s93 = sphi 0, %s93
    %s95 = sphi 0, %s93
    %s96 = sphi 0, %s95
    %s110 = sphi 0, %s96
    %s114 = sphi 0, %s114
    %s116 = sphi 0, %s114
    %s117 = sphi 0, %s116
    %s131 = sphi 0, %s117
    %s135 = sphi 0, %s135
    %s137 = sphi 0, %s135
    %s138 = sphi 0, %s137
    %s152 = sphi 0, %s138
    %s158 = sphi 0, %s160
    %s161 = sphi 0, %s158
    %s162 = sphi 0, %s161
    %s178 = sphi 0, %s162
  $region4: #{decoder_forward.1} parent=0 // loop_header_branch
    %15 = sbr.rel (%p13) target = $region8
  $region5: #{decoder_forward.1} parent=0 // loop_body
    %s17 = ssub.s32 %s12, 1
    %s18 = ssub.s32 %s12, 2
    %s19 = sadd.s32 %s12, 1
    %s20 = ssub.s32 %s12, %s19
    %p21 = scmp.eq.s32.totalorder %s20, 0
    %s23 = sadd.s32 %s22, 1
    %s24 = scalar_select %p21, %s22, %s23
    %p27 = pneg %p21
    %p28 = scmp.eq.s32.totalorder %s12, 1
    %p29 = por %p27, %p28
    %p30 = scmp.ne.s32.totalorder %s22, %s25
    %p31 = scmp.eq.s32.totalorder %s12, 0
    %p32 = por %p30, %p31
    %p33 = scmp.ne.s32.totalorder %s22, %s25
    %p34 = scmp.eq.s32.totalorder %s17, 1
    %p35 = por %p33, %p34
    %p36 = scmp.ne.s32.totalorder %s25, %s26
    %p37 = scmp.eq.s32.totalorder %s17, 0
    %p38 = por %p36, %p37
    %p39 = scmp.ne.s32.totalorder %s25, %s26
    %p40 = scmp.eq.s32.totalorder %s18, 1
    %p41 = por %p39, %p40
    %p43 = scmp.ne.s32.totalorder %s26, %s42
    %p44 = scmp.eq.s32.totalorder %s18, 0
    %p45 = por %p43, %p44
    %s46 = ssub.s32 %s12, %s19
    %p47 = scmp.eq.s32.totalorder %s46, 0
    %s49 = sadd.s32 %s48, 1
    %s50 = scalar_select %p47, %s48, %s49
    %p53 = pneg %p47
    %p54 = scmp.eq.s32.totalorder %s12, 1
    %p55 = por %p53, %p54
    %p56 = scmp.ne.s32.totalorder %s48, %s51
    %p57 = scmp.eq.s32.totalorder %s12, 0
    %p58 = por %p56, %p57
    %p59 = scmp.ne.s32.totalorder %s48, %s51
    %p60 = scmp.eq.s32.totalorder %s17, 1
    %p61 = por %p59, %p60
    %p62 = scmp.ne.s32.totalorder %s51, %s52
    %p63 = scmp.eq.s32.totalorder %s17, 0
    %p64 = por %p62, %p63
    %p65 = scmp.ne.s32.totalorder %s51, %s52
    %p66 = scmp.eq.s32.totalorder %s18, 1
    %p67 = por %p65, %p66
    %p69 = scmp.ne.s32.totalorder %s52, %s68
    %p70 = scmp.eq.s32.totalorder %s18, 0
    %p71 = por %p69, %p70
    %s73 = sadd.s32 %s72, 1
    %p76 = scmp.eq.s32.totalorder %s12, 1
    %p77 = scmp.ne.s32.totalorder %s72, %s74
    %p78 = scmp.eq.s32.totalorder %s12, 0
    %p79 = por %p77, %p78
    %p80 = scmp.ne.s32.totalorder %s72, %s74
    %p81 = scmp.eq.s32.totalorder %s17, 1
    %p82 = por %p80, %p81
    %p83 = scmp.ne.s32.totalorder %s74, %s75
    %p84 = scmp.eq.s32.totalorder %s17, 0
    %p85 = por %p83, %p84
    %p86 = scmp.ne.s32.totalorder %s74, %s75
    %p87 = scmp.eq.s32.totalorder %s18, 1
    %p88 = por %p86, %p87
    %p90 = scmp.ne.s32.totalorder %s75, %s89
    %p91 = scmp.eq.s32.totalorder %s18, 0
    %p92 = por %p90, %p91
    %s94 = sadd.s32 %s93, 1
    %p97 = scmp.eq.s32.totalorder %s12, 1
    %p98 = scmp.ne.s32.totalorder %s93, %s95
    %p99 = scmp.eq.s32.totalorder %s12, 0
    %p100 = por %p98, %p99
    %p101 = scmp.ne.s32.totalorder %s93, %s95
    %p102 = scmp.eq.s32.totalorder %s17, 1
    %p103 = por %p101, %p102
    %p104 = scmp.ne.s32.totalorder %s95, %s96
    %p105 = scmp.eq.s32.totalorder %s17, 0
    %p106 = por %p104, %p105
    %p107 = scmp.ne.s32.totalorder %s95, %s96
    %p108 = scmp.eq.s32.totalorder %s18, 1
    %p109 = por %p107, %p108
    %p111 = scmp.ne.s32.totalorder %s96, %s110
    %p112 = scmp.eq.s32.totalorder %s18, 0
    %p113 = por %p111, %p112
    %s115 = sadd.s32 %s114, 1
    %p118 = scmp.eq.s32.totalorder %s12, 1
    %p119 = scmp.ne.s32.totalorder %s114, %s116
    %p120 = scmp.eq.s32.totalorder %s12, 0
    %p121 = por %p119, %p120
    %p122 = scmp.ne.s32.totalorder %s114, %s116
    %p123 = scmp.eq.s32.totalorder %s17, 1
    %p124 = por %p122, %p123
    %p125 = scmp.ne.s32.totalorder %s116, %s117
    %p126 = scmp.eq.s32.totalorder %s17, 0
    %p127 = por %p125, %p126
    %p128 = scmp.ne.s32.totalorder %s116, %s117
    %p129 = scmp.eq.s32.totalorder %s18, 1
    %p130 = por %p128, %p129
    %p132 = scmp.ne.s32.totalorder %s117, %s131
    %p133 = scmp.eq.s32.totalorder %s18, 0
    %p134 = por %p132, %p133
    %s136 = sadd.s32 %s135, 1
    %p139 = scmp.eq.s32.totalorder %s12, 1
    %p140 = scmp.ne.s32.totalorder %s135, %s137
    %p141 = scmp.eq.s32.totalorder %s12, 0
    %p142 = por %p140, %p141
    %p143 = scmp.ne.s32.totalorder %s135, %s137
    %p144 = scmp.eq.s32.totalorder %s17, 1
    %p145 = por %p143, %p144
    %p146 = scmp.ne.s32.totalorder %s137, %s138
    %p147 = scmp.eq.s32.totalorder %s17, 0
    %p148 = por %p146, %p147
    %p149 = scmp.ne.s32.totalorder %s137, %s138
    %p150 = scmp.eq.s32.totalorder %s18, 1
    %p151 = por %p149, %p150
    %p153 = scmp.ne.s32.totalorder %s138, %s152
    %p154 = scmp.eq.s32.totalorder %s18, 0
    %p155 = por %p153, %p154
    %s156 = ssub.s32 %s12, %s19
    %p157 = scmp.eq.s32.totalorder %s156, 0
    %s159 = sadd.s32 %s158, 1
    %s160 = scalar_select %p157, %s158, %s159
    %p163 = pneg %p157
    %p164 = scmp.eq.s32.totalorder %s12, 1
    %p165 = por %p163, %p164
    %p166 = scmp.ne.s32.totalorder %s158, %s161
    %p167 = scmp.eq.s32.totalorder %s12, 0
    %p168 = por %p166, %p167
    %p169 = scmp.ne.s32.totalorder %s158, %s161
    %p170 = scmp.eq.s32.totalorder %s17, 1
    %p171 = por %p169, %p170
    %p172 = scmp.ne.s32.totalorder %s161, %s162
    %p173 = scmp.eq.s32.totalorder %s17, 0
    %p174 = por %p172, %p173
    %p175 = scmp.ne.s32.totalorder %s161, %s162
    %p176 = scmp.eq.s32.totalorder %s18, 1
    %p177 = por %p175, %p176
    %p179 = scmp.ne.s32.totalorder %s162, %s178
    %p180 = scmp.eq.s32.totalorder %s18, 0
    %p181 = por %p179, %p180
    %p182 = scmp.le.s32.totalorder 1, %s12
    %p183 = scmp.lt.s32.totalorder %s12, 3
    %p184 = pnand %p182, %p183
    %p185 = pneg %p184
    // Predicated region
    $region9: #{decoder_forward.1} parent=5 // pred_check
      _
    $region10: #{decoder_forward.1} parent=5 // pred_check_branch
      %187 = sbr.rel (%p184) target = $region12
    $region11: #{decoder_forward.1} parent=5 // pred_region
      %s188 = ssub.s32 %s12, 1
      // Predicated region
      $region13: #{decoder_forward.1} parent=11 // pred_check
        %p189 = pneg %p85
      $region14: #{decoder_forward.1} parent=11 // pred_check_branch
        %191 = sbr.rel (%p189) target = $region16
      $region15: #{decoder_forward.1} parent=11 // pred_region
        _
      $region16: #{decoder_forward.1} parent=11 // pred_fallthru
        _
      // Predicated region
      $region17: #{decoder_forward.1} parent=11 // pred_check
        %p192 = pneg %p106
      $region18: #{decoder_forward.1} parent=11 // pred_check_branch
        %194 = sbr.rel (%p192) target = $region20
      $region19: #{decoder_forward.1} parent=11 // pred_region
        _
      $region20: #{decoder_forward.1} parent=11 // pred_fallthru
        _
      // Predicated region
      $region21: #{decoder_forward.1} parent=11 // pred_check
        %p195 = pneg %p127
      $region22: #{decoder_forward.1} parent=11 // pred_check_branch
        %197 = sbr.rel (%p195) target = $region24
      $region23: #{decoder_forward.1} parent=11 // pred_region
        _
      $region24: #{decoder_forward.1} parent=11 // pred_fallthru
        _
      // Predicated region
      $region25: #{decoder_forward.1} parent=11 // pred_check
        %p198 = pneg %p148
      $region26: #{decoder_forward.1} parent=11 // pred_check_branch
        %200 = sbr.rel (%p198) target = $region28
      $region27: #{decoder_forward.1} parent=11 // pred_region
        _
      $region28: #{decoder_forward.1} parent=11 // pred_fallthru
        _
    $region12: #{decoder_forward.1} parent=5 // pred_fallthru
      _
    %p201 = scmp.lt.s32.totalorder %s12, 2
    // Predicated region
    $region29: #{decoder_forward.1} parent=5 // pred_check
      %p202 = pneg %p201
    $region30: #{decoder_forward.1} parent=5 // pred_check_branch
      %204 = sbr.rel (%p202) target = $region32
    $region31: #{decoder_forward.1} parent=5 // pred_region
      // Predicated region
      $region33: #{decoder_forward.1} parent=31 // pred_check
        %p205 = pneg %p32
      $region34: #{decoder_forward.1} parent=31 // pred_check_branch
        %207 = sbr.rel (%p205) target = $region36
      $region35: #{decoder_forward.1} parent=31 // pred_region
        %p208 = scmp.lt.s32.totalorder %s12, 1
        %s209 = scalar_select %p208, %s12, 1
        %s210 = smul.addr %s209, 8
        %s211 = smul.addr %s210, 4
        %s212 = scalar_lea.vmem %s0, %s211
      $region36: #{decoder_forward.1} parent=31 // pred_fallthru
        _
      // Predicated region
      $region37: #{decoder_forward.1} parent=31 // pred_check
        %p213 = pneg %p58
      $region38: #{decoder_forward.1} parent=31 // pred_check_branch
        %215 = sbr.rel (%p213) target = $region40
      $region39: #{decoder_forward.1} parent=31 // pred_region
        %p216 = scmp.lt.s32.totalorder %s12, 1
        %s217 = scalar_select %p216, %s12, 1
        %s218 = smul.addr %s217, 16
        %s219 = smul.addr %s218, 4
        %s220 = scalar_lea.vmem %s1, %s219
      $region40: #{decoder_forward.1} parent=31 // pred_fallthru
        _
    $region32: #{decoder_forward.1} parent=5 // pred_fallthru
      _
    %p221 = scmp.le.s32.totalorder 1, %s12
    %p222 = scmp.lt.s32.totalorder %s12, 3
    %p223 = pnand %p221, %p222
    %p224 = pneg %p223
    // Predicated region
    $region41: #{decoder_forward.1} parent=5 // pred_check
      _
    $region42: #{decoder_forward.1} parent=5 // pred_check_branch
      %226 = sbr.rel (%p223) target = $region44
    $region43: #{decoder_forward.1} parent=5 // pred_region
      %s227 = ssub.s32 %s12, 1
      %p228 = scmp.lt.s32.totalorder %s17, 1
      %s229 = scalar_select %p228, %s17, 1
      %s230 = smul.addr %s229, 8
      %s231 = smul.addr %s230, 4
      %s232 = scalar_lea.vmem %s0, %s231
      %p233 = pneg %p38
      %p234 = pneg %p35
      %p235 = scmp.lt.s32.totalorder %s17, 1
      %s236 = scalar_select %p235, %s17, 1
      %s237 = smul.addr %s236, 16
      %s238 = smul.addr %s237, 4
      %s239 = scalar_lea.vmem %s1, %s238
      %p240 = pneg %p64
      %p241 = pneg %p61
      %p242 = pneg %p85
      %p243 = pneg %p82
      %p244 = pneg %p106
      %p245 = pneg %p103
      %p246 = pneg %p127
      %p247 = pneg %p124
      %p248 = pneg %p148
      %p249 = pneg %p145
      %p250 = pneg %p174
      %p251 = pneg %p171
      %p252 = scmp.lt.s32.totalorder %s17, 1
      %s253 = scalar_select %p252, %s17, 1
      %s254 = smul.addr %s253, 16
      %s255 = smul.addr %s254, 8
      %s256 = scalar_lea.vmem %s6, %s255
      %p257 = scmp.lt.s32.totalorder %s17, 1
      %s258 = scalar_select %p257, %s17, 1
      %s259 = smul.addr %s258, 8
      %s260 = smul.addr %s259, 4
      %s261 = scalar_lea.vmem %s0, %s260
      %p262 = scmp.lt.s32.totalorder %s17, 1
      %s263 = scalar_select %p262, %s17, 1
      %s264 = smul.addr %s263, 16
      %s265 = smul.addr %s264, 4
      %s266 = scalar_lea.vmem %s1, %s265
      %p267 = scmp.lt.s32.totalorder %s17, 1
      %s268 = scalar_select %p267, %s17, 1
      %s269 = smul.addr %s268, 16
      %s270 = smul.addr %s269, 8
      %s271 = scalar_lea.vmem %s6, %s270
      %v273 = vld [vmem:[%s261] sm:$0xf]
      %v274 = vld [vmem:[%s261 + $0x4] sm:$0xf]
      %v275 = vld [vmem:[%s261 + $0x8] sm:$0xf]
      %v276 = vld [vmem:[%s261 + $0xc] sm:$0xf]
      %v277 = vld [vmem:[%s261 + $0x10] sm:$0xf]
      %v278 = vld [vmem:[%s261 + $0x14] sm:$0xf]
      %v279 = vld [vmem:[%s261 + $0x18] sm:$0xf]
      %v280 = vld [vmem:[%s261 + $0x1c] sm:$0xf]
      %v281 = vld [vmem:[%s2] sm:$0xf]
      %v282 = vld [vmem:[%s3] sm:$0x1]
      %v284 = vlaneseq
      %v285 = vshrl.u32 %v284, 7
      %v286 = vsub.s32 0, %v285
      %v287 = vrot.slane %v282, %v286
      %v297 = vunpack.c.l.b16 %v273
      %v298 = vunpack.c.l.b16 %v274
      %v299 = vunpack.c.l.b16 %v275
      %v300 = vunpack.c.l.b16 %v276
      %v301 = vunpack.c.l.b16 %v277
      %v302 = vunpack.c.l.b16 %v278
      %v303 = vunpack.c.l.b16 %v279
      %v304 = vunpack.c.l.b16 %v280
      %v305 = vpack.c.b16 %v298, %v297
      %v306 = vpack.c.b16 %v300, %v299
      %v307 = vpack.c.b16 %v302, %v301
      %v308 = vpack.c.b16 %v304, %v303
      %vm309 = vcmask 64512
      %v311 = vsel %vm309, %v305, 0
      %v314 = vsel %vm309, %v306, 0
      %v317 = vsel %vm309, %v307, 0
      %v320 = vsel %vm309, %v308, 0
      %vm322 = vcmask 1043456
      %v324 = vsel %vm322, %v281, 0
      %326 = vmatprep.subr.bf16.mxu0 0
      %327 = vmatpush1.bf16.msra.mxu0 %v324
      %328 = vmatprep.subr.bf16.mxu0 0
      %329 = vmatpush1.bf16.msra.mxu0 0
      %330 = vmatprep.subr.bf16.mxu0 0
      %331 = vmatpush1.bf16.msra.mxu0 0
      %332 = vmatprep.subr.bf16.mxu0 0
      %333 = vmatpush1.bf16.msra.mxu0 0
      %334 = vmatprep.subr.bf16.mxu0 0
      %335 = vmatpush1.bf16.msra.mxu0 0
      %336 = vmatprep.subr.bf16.mxu0 0
      %337 = vmatpush1.bf16.msra.mxu0 0
      %338 = vmatprep.subr.bf16.mxu0 0
      %339 = vmatpush1.bf16.msra.mxu0 0
      %340 = vmatprep.subr.bf16.mxu0 0
      %341 = vmatpush1.bf16.msra.mxu0 0
      %342 = vmatprep.subr.bf16.mxu0 0
      %343 = vmatpush1.bf16.msra.mxu0 0
      %344 = vmatprep.subr.bf16.mxu0 0
      %345 = vmatpush1.bf16.msra.mxu0 0
      %346 = vmatprep.subr.bf16.mxu0 0
      %347 = vmatpush1.bf16.msra.mxu0 0
      %348 = vmatprep.subr.bf16.mxu0 0
      %349 = vmatpush1.bf16.msra.mxu0 0
      %350 = vmatprep.subr.bf16.mxu0 0
      %351 = vmatpush1.bf16.msra.mxu0 0
      %352 = vmatprep.subr.bf16.mxu0 0
      %353 = vmatpush1.bf16.msra.mxu0 0
      %354 = vmatprep.subr.bf16.mxu0 0
      %355 = vmatpush1.bf16.msra.mxu0 0
      %356 = vmatprep.subr.bf16.mxu0 0
      %357 = vmatpush1.bf16.msra.mxu0 0
      %358 = vmatprep.mubr.bf16.mxu0 0
      %359 = vmatmul.mubr.bf16.gmra.mrb[0].mxu0 %v311
      %v360 = vpop.f32.mrb[0].mxu0
      %v361 = vadd.f32 %v287, %v360
      %v362 = vpop.f32.mrb[0].mxu0
      %v363 = vpop.f32.mrb[0].mxu0
      %v364 = vadd.f32 %v287, %v363
      %v365 = vpop.f32.mrb[0].mxu0
      %366 = vmatprep.mubr.bf16.mxu0 0
      %367 = vmatmul.mubr.bf16.gmra.mrb[0].mxu0 %v314
      %v368 = vpop.f32.mrb[0].mxu0
      %v369 = vadd.f32 %v287, %v368
      %v370 = vpop.f32.mrb[0].mxu0
      %v371 = vpop.f32.mrb[0].mxu0
      %v372 = vadd.f32 %v287, %v371
      %v373 = vpop.f32.mrb[0].mxu0
      %374 = vmatprep.mubr.bf16.mxu0 0
      %375 = vmatmul.mubr.bf16.gmra.mrb[0].mxu0 %v317
      %v376 = vpop.f32.mrb[0].mxu0
      %v377 = vadd.f32 %v287, %v376
      %v378 = vpop.f32.mrb[0].mxu0
      %v379 = vpop.f32.mrb[0].mxu0
      %v380 = vadd.f32 %v287, %v379
      %v381 = vpop.f32.mrb[0].mxu0
      %382 = vmatprep.mubr.bf16.mxu0 0
      %383 = vmatmul.mubr.bf16.gmra.mrb[0].mxu0 %v320
      %v384 = vpop.f32.mrb[0].mxu0
      %v385 = vadd.f32 %v287, %v384
      %v386 = vpop.f32.mrb[0].mxu0
      %v387 = vpop.f32.mrb[0].mxu0
      %v388 = vadd.f32 %v287, %v387
      %v389 = vpop.f32.mrb[0].mxu0
      %390 = vdwg.mxu0
      %v391 = vpack.c.bf16 %v364, %v361
      %v392 = vpack.c.bf16 %v372, %v369
      %v393 = vpack.c.bf16 %v380, %v377
      %v394 = vpack.c.bf16 %v388, %v385
      %v399 = vunpack.c.l.b16 %v391
      %v400 = vunpack.c.h.b16 %v391
      %v401 = vunpack.c.l.b16 %v392
      %v402 = vunpack.c.h.b16 %v392
      %v403 = vunpack.c.l.b16 %v393
      %v404 = vunpack.c.h.b16 %v393
      %v405 = vunpack.c.l.b16 %v394
      %v406 = vunpack.c.h.b16 %v394
      %v407 = vpack.c.b16 %v399, %v399
      %v408 = vpack.c.b16 %v400, %v400
      %v409 = vpack.c.b16 %v401, %v401
      %v410 = vpack.c.b16 %v402, %v402
      %v411 = vpack.c.b16 %v403, %v403
      %v412 = vpack.c.b16 %v404, %v404
      %v413 = vpack.c.b16 %v405, %v405
      %v414 = vpack.c.b16 %v406, %v406
      %415 = vrot.lane.b32.xlu0 %v407, 120
      %v416 = vpop.permute.xlu0 %415
      %417 = vrot.lane.b32.xlu0 %v408, 120
      %v418 = vpop.permute.xlu0 %417
      %419 = vrot.lane.b32.xlu0 %v409, 120
      %v420 = vpop.permute.xlu0 %419
      %421 = vrot.lane.b32.xlu0 %v410, 120
      %v422 = vpop.permute.xlu0 %421
      %423 = vrot.lane.b32.xlu0 %v411, 120
      %v424 = vpop.permute.xlu0 %423
      %425 = vrot.lane.b32.xlu0 %v412, 120
      %v426 = vpop.permute.xlu0 %425
      %427 = vrot.lane.b32.xlu0 %v413, 120
      %v428 = vpop.permute.xlu0 %427
      %429 = vrot.lane.b32.xlu0 %v414, 120
      %v430 = vpop.permute.xlu0 %429
      %v431 = vunpack.c.l.b16 %v416
      %v432 = vunpack.c.l.b16 %v418
      %v433 = vunpack.c.l.b16 %v420
      %v434 = vunpack.c.l.b16 %v422
      %v435 = vunpack.c.l.b16 %v424
      %v436 = vunpack.c.l.b16 %v426
      %v437 = vunpack.c.l.b16 %v428
      %v438 = vunpack.c.l.b16 %v430
      %v439 = vpack.c.b16 %v431, %v431
      %v440 = vpack.c.b16 %v432, %v432
      %v441 = vpack.c.b16 %v433, %v433
      %v442 = vpack.c.b16 %v434, %v434
      %v443 = vpack.c.b16 %v435, %v435
      %v444 = vpack.c.b16 %v436, %v436
      %v445 = vpack.c.b16 %v437, %v437
      %v446 = vpack.c.b16 %v438, %v438
      %v448 = vshrl.u32 %v407, 16
      %v450 = vrot.slane %v448, 7
      %v451 = vshll.u32 %v407, 16
      %v453 = vor.u32 %v450, %v451
      %v455 = vshrl.u32 %v439, 16
      %v457 = vrot.slane %v455, 7
      %v458 = vshll.u32 %v439, 16
      %v460 = vor.u32 %v457, %v458
      %v462 = vshrl.u32 %v408, 16
      %v464 = vrot.slane %v462, 7
      %v465 = vshll.u32 %v408, 16
      %v467 = vor.u32 %v464, %v465
      %v469 = vshrl.u32 %v440, 16
      %v471 = vrot.slane %v469, 7
      %v472 = vshll.u32 %v440, 16
      %v474 = vor.u32 %v471, %v472
      %v476 = vshrl.u32 %v409, 16
      %v478 = vrot.slane %v476, 7
      %v479 = vshll.u32 %v409, 16
      %v481 = vor.u32 %v478, %v479
      %v483 = vshrl.u32 %v441, 16
      %v485 = vrot.slane %v483, 7
      %v486 = vshll.u32 %v441, 16
      %v488 = vor.u32 %v485, %v486
      %v490 = vshrl.u32 %v410, 16
      %v492 = vrot.slane %v490, 7
      %v493 = vshll.u32 %v410, 16
      %v495 = vor.u32 %v492, %v493
      %v497 = vshrl.u32 %v442, 16
      %v499 = vrot.slane %v497, 7
      %v500 = vshll.u32 %v442, 16
      %v502 = vor.u32 %v499, %v500
      %v504 = vshrl.u32 %v411, 16
      %v506 = vrot.slane %v504, 7
      %v507 = vshll.u32 %v411, 16
      %v509 = vor.u32 %v506, %v507
      %v511 = vshrl.u32 %v443, 16
      %v513 = vrot.slane %v511, 7
      %v514 = vshll.u32 %v443, 16
      %v516 = vor.u32 %v513, %v514
      %v518 = vshrl.u32 %v412, 16
      %v520 = vrot.slane %v518, 7
      %v521 = vshll.u32 %v412, 16
      %v523 = vor.u32 %v520, %v521
      %v525 = vshrl.u32 %v444, 16
      %v527 = vrot.slane %v525, 7
      %v528 = vshll.u32 %v444, 16
      %v530 = vor.u32 %v527, %v528
      %v532 = vshrl.u32 %v413, 16
      %v534 = vrot.slane %v532, 7
      %v535 = vshll.u32 %v413, 16
      %v537 = vor.u32 %v534, %v535
      %v539 = vshrl.u32 %v445, 16
      %v541 = vrot.slane %v539, 7
      %v542 = vshll.u32 %v445, 16
      %v544 = vor.u32 %v541, %v542
      %v546 = vshrl.u32 %v414, 16
      %v548 = vrot.slane %v546, 7
      %v549 = vshll.u32 %v414, 16
      %v551 = vor.u32 %v548, %v549
      %v553 = vshrl.u32 %v446, 16
      %v555 = vrot.slane %v553, 7
      %v556 = vshll.u32 %v446, 16
      %v558 = vor.u32 %v555, %v556
      %vm575 = vcmask 1040384
      %vm576 = vsmask.f32 256
      %vm577 = vmand %vm575, %vm576
      %v578 = vsel %vm577, 0, %v453
      %v579 = vsel %vm577, 0, %v460
      %v580 = vsel %vm577, 0, %v467
      %v581 = vsel %vm577, 0, %v474
      %v582 = vsel %vm577, 0, %v481
      %v583 = vsel %vm577, 0, %v488
      %v584 = vsel %vm577, 0, %v495
      %v585 = vsel %vm577, 0, %v502
      %v586 = vsel %vm577, 0, %v509
      %v587 = vsel %vm577, 0, %v516
      %v588 = vsel %vm577, 0, %v523
      %v589 = vsel %vm577, 0, %v530
      %v590 = vsel %vm577, 0, %v537
      %v591 = vsel %vm577, 0, %v544
      %v592 = vsel %vm577, 0, %v551
      %v593 = vsel %vm577, 0, %v558
      %vm594 = vcmask 1044480
      %vm595 = vsmask.f32 4352
      %vm596 = vmand %vm594, %vm595
      %v597 = vsel %vm596, %v578, 0
      %v598 = vsel %vm596, %v579, 0
      %v599 = vsel %vm596, %v580, 0
      %v600 = vsel %vm596, %v581, 0
      %v601 = vsel %vm596, %v582, 0
      %v602 = vsel %vm596, %v583, 0
      %v603 = vsel %vm596, %v584, 0
      %v604 = vsel %vm596, %v585, 0
      %v605 = vsel %vm596, %v586, 0
      %v606 = vsel %vm596, %v587, 0
      %v607 = vsel %vm596, %v588, 0
      %v608 = vsel %vm596, %v589, 0
      %v609 = vsel %vm596, %v590, 0
      %v610 = vsel %vm596, %v591, 0
      %v611 = vsel %vm596, %v592, 0
      %v612 = vsel %vm596, %v593, 0
      %v613 = vld [vmem:[%s266] sm:$0xf]
      %v614 = vld [vmem:[%s266 + $0x4] sm:$0xf]
      %v615 = vld [vmem:[%s266 + $0x8] sm:$0xf]
      %v616 = vld [vmem:[%s266 + $0xc] sm:$0xf]
      %v617 = vld [vmem:[%s266 + $0x10] sm:$0xf]
      %v618 = vld [vmem:[%s266 + $0x14] sm:$0xf]
      %v619 = vld [vmem:[%s266 + $0x18] sm:$0xf]
      %v620 = vld [vmem:[%s266 + $0x1c] sm:$0xf]
      %v621 = vld [vmem:[%s266 + $0x20] sm:$0xf]
      %v622 = vld [vmem:[%s266 + $0x24] sm:$0xf]
      %v623 = vld [vmem:[%s266 + $0x28] sm:$0xf]
      %v624 = vld [vmem:[%s266 + $0x2c] sm:$0xf]
      %v625 = vld [vmem:[%s266 + $0x30] sm:$0xf]
      %v626 = vld [vmem:[%s266 + $0x34] sm:$0xf]
      %v627 = vld [vmem:[%s266 + $0x38] sm:$0xf]
      %v628 = vld [vmem:[%s266 + $0x3c] sm:$0xf]
      %v645 = vunpack.c.l.b16 %v613
      %v646 = vunpack.c.l.b16 %v614
      %v647 = vunpack.c.l.b16 %v615
      %v648 = vunpack.c.l.b16 %v616
      %v649 = vunpack.c.l.b16 %v617
      %v650 = vunpack.c.l.b16 %v618
      %v651 = vunpack.c.l.b16 %v619
      %v652 = vunpack.c.l.b16 %v620
      %v653 = vunpack.c.l.b16 %v621
      %v654 = vunpack.c.l.b16 %v622
      %v655 = vunpack.c.l.b16 %v623
      %v656 = vunpack.c.l.b16 %v624
      %v657 = vunpack.c.l.b16 %v625
      %v658 = vunpack.c.l.b16 %v626
      %v659 = vunpack.c.l.b16 %v627
      %v660 = vunpack.c.l.b16 %v628
      %v661 = vpack.c.b16 %v645, %v645
      %v662 = vpack.c.b16 %v646, %v646
      %v663 = vpack.c.b16 %v647, %v647
      %v664 = vpack.c.b16 %v648, %v648
      %v665 = vpack.c.b16 %v649, %v649
      %v666 = vpack.c.b16 %v650, %v650
      %v667 = vpack.c.b16 %v651, %v651
      %v668 = vpack.c.b16 %v652, %v652
      %v669 = vpack.c.b16 %v653, %v653
      %v670 = vpack.c.b16 %v654, %v654
      %v671 = vpack.c.b16 %v655, %v655
      %v672 = vpack.c.b16 %v656, %v656
      %v673 = vpack.c.b16 %v657, %v657
      %v674 = vpack.c.b16 %v658, %v658
      %v675 = vpack.c.b16 %v659, %v659
      %v676 = vpack.c.b16 %v660, %v660
      %v678 = vshrl.u32 %v661, 16
      %v680 = vrot.slane %v678, 7
      %v681 = vshll.u32 %v661, 16
      %v683 = vor.u32 %v680, %v681
      %v685 = vshrl.u32 %v662, 16
      %v687 = vrot.slane %v685, 7
      %v688 = vshll.u32 %v662, 16
      %v690 = vor.u32 %v687, %v688
      %v692 = vshrl.u32 %v663, 16
      %v694 = vrot.slane %v692, 7
      %v695 = vshll.u32 %v663, 16
      %v697 = vor.u32 %v694, %v695
      %v699 = vshrl.u32 %v664, 16
      %v701 = vrot.slane %v699, 7
      %v702 = vshll.u32 %v664, 16
      %v704 = vor.u32 %v701, %v702
      %v706 = vshrl.u32 %v665, 16
      %v708 = vrot.slane %v706, 7
      %v709 = vshll.u32 %v665, 16
      %v711 = vor.u32 %v708, %v709
      %v713 = vshrl.u32 %v666, 16
      %v715 = vrot.slane %v713, 7
      %v716 = vshll.u32 %v666, 16
      %v718 = vor.u32 %v715, %v716
      %v720 = vshrl.u32 %v667, 16
      %v722 = vrot.slane %v720, 7
      %v723 = vshll.u32 %v667, 16
      %v725 = vor.u32 %v722, %v723
      %v727 = vshrl.u32 %v668, 16
      %v729 = vrot.slane %v727, 7
      %v730 = vshll.u32 %v668, 16
      %v732 = vor.u32 %v729, %v730
      %v734 = vshrl.u32 %v669, 16
      %v736 = vrot.slane %v734, 7
      %v737 = vshll.u32 %v669, 16
      %v739 = vor.u32 %v736, %v737
      %v741 = vshrl.u32 %v670, 16
      %v743 = vrot.slane %v741, 7
      %v744 = vshll.u32 %v670, 16
      %v746 = vor.u32 %v743, %v744
      %v748 = vshrl.u32 %v671, 16
      %v750 = vrot.slane %v748, 7
      %v751 = vshll.u32 %v671, 16
      %v753 = vor.u32 %v750, %v751
      %v755 = vshrl.u32 %v672, 16
      %v757 = vrot.slane %v755, 7
      %v758 = vshll.u32 %v672, 16
      %v760 = vor.u32 %v757, %v758
      %v762 = vshrl.u32 %v673, 16
      %v764 = vrot.slane %v762, 7
      %v765 = vshll.u32 %v673, 16
      %v767 = vor.u32 %v764, %v765
      %v769 = vshrl.u32 %v674, 16
      %v771 = vrot.slane %v769, 7
      %v772 = vshll.u32 %v674, 16
      %v774 = vor.u32 %v771, %v772
      %v776 = vshrl.u32 %v675, 16
      %v778 = vrot.slane %v776, 7
      %v779 = vshll.u32 %v675, 16
      %v781 = vor.u32 %v778, %v779
      %v783 = vshrl.u32 %v676, 16
      %v785 = vrot.slane %v783, 7
      %v786 = vshll.u32 %v676, 16
      %v788 = vor.u32 %v785, %v786
      %v805 = vsel %vm577, 0, %v683
      %v806 = vsel %vm577, 0, %v690
      %v807 = vsel %vm577, 0, %v697
      %v808 = vsel %vm577, 0, %v704
      %v809 = vsel %vm577, 0, %v711
      %v810 = vsel %vm577, 0, %v718
      %v811 = vsel %vm577, 0, %v725
      %v812 = vsel %vm577, 0, %v732
      %v813 = vsel %vm577, 0, %v739
      %v814 = vsel %vm577, 0, %v746
      %v815 = vsel %vm577, 0, %v753
      %v816 = vsel %vm577, 0, %v760
      %v817 = vsel %vm577, 0, %v767
      %v818 = vsel %vm577, 0, %v774
      %v819 = vsel %vm577, 0, %v781
      %v820 = vsel %vm577, 0, %v788
      %v821 = vsel %vm596, %v805, 0
      %v822 = vsel %vm596, %v806, 0
      %v823 = vsel %vm596, %v807, 0
      %v824 = vsel %vm596, %v808, 0
      %v825 = vsel %vm596, %v809, 0
      %v826 = vsel %vm596, %v810, 0
      %v827 = vsel %vm596, %v811, 0
      %v828 = vsel %vm596, %v812, 0
      %v829 = vsel %vm596, %v813, 0
      %v830 = vsel %vm596, %v814, 0
      %v831 = vsel %vm596, %v815, 0
      %v832 = vsel %vm596, %v816, 0
      %v833 = vsel %vm596, %v817, 0
      %v834 = vsel %vm596, %v818, 0
      %v835 = vsel %vm596, %v819, 0
      %v836 = vsel %vm596, %v820, 0
      %853 = vrot.lane.b32.xlu0 0, 8
      %v854 = vpop.permute.xlu0 %853
      %855 = vrot.lane.b32.xlu0 %v821, 8
      %v856 = vpop.permute.xlu0 %855
      %857 = vrot.lane.b32.xlu0 %v822, 8
      %v858 = vpop.permute.xlu0 %857
      %859 = vrot.lane.b32.xlu0 %v823, 8
      %v860 = vpop.permute.xlu0 %859
      %861 = vrot.lane.b32.xlu0 %v824, 8
      %v862 = vpop.permute.xlu0 %861
      %863 = vrot.lane.b32.xlu0 %v825, 8
      %v864 = vpop.permute.xlu0 %863
      %865 = vrot.lane.b32.xlu0 %v826, 8
      %v866 = vpop.permute.xlu0 %865
      %867 = vrot.lane.b32.xlu0 %v827, 8
      %v868 = vpop.permute.xlu0 %867
      %869 = vrot.lane.b32.xlu0 %v828, 8
      %v870 = vpop.permute.xlu0 %869
      %871 = vrot.lane.b32.xlu0 %v829, 8
      %v872 = vpop.permute.xlu0 %871
      %873 = vrot.lane.b32.xlu0 %v830, 8
      %v874 = vpop.permute.xlu0 %873
      %875 = vrot.lane.b32.xlu0 %v831, 8
      %v876 = vpop.permute.xlu0 %875
      %877 = vrot.lane.b32.xlu0 %v832, 8
      %v878 = vpop.permute.xlu0 %877
      %879 = vrot.lane.b32.xlu0 %v833, 8
      %v880 = vpop.permute.xlu0 %879
      %881 = vrot.lane.b32.xlu0 %v834, 8
      %v882 = vpop.permute.xlu0 %881
      %883 = vrot.lane.b32.xlu0 %v835, 8
      %v884 = vpop.permute.xlu0 %883
      %v886 = vshrl.u32 0, 16
      %v888 = vshll.u32 0, 16
      %v890 = vrot.slane %v888, 1
      %v891 = vor.u32 %v886, %v890
      %v893 = vshrl.u32 %v597, 16
      %v895 = vshll.u32 %v597, 16
      %v897 = vrot.slane %v895, 1
      %v898 = vor.u32 %v893, %v897
      %v900 = vshrl.u32 %v598, 16
      %v902 = vshll.u32 %v598, 16
      %v904 = vrot.slane %v902, 1
      %v905 = vor.u32 %v900, %v904
      %v907 = vshrl.u32 %v599, 16
      %v909 = vshll.u32 %v599, 16
      %v911 = vrot.slane %v909, 1
      %v912 = vor.u32 %v907, %v911
      %v914 = vshrl.u32 %v600, 16
      %v916 = vshll.u32 %v600, 16
      %v918 = vrot.slane %v916, 1
      %v919 = vor.u32 %v914, %v918
      %v921 = vshrl.u32 %v601, 16
      %v923 = vshll.u32 %v601, 16
      %v925 = vrot.slane %v923, 1
      %v926 = vor.u32 %v921, %v925
      %v928 = vshrl.u32 %v602, 16
      %v930 = vshll.u32 %v602, 16
      %v932 = vrot.slane %v930, 1
      %v933 = vor.u32 %v928, %v932
      %v935 = vshrl.u32 %v603, 16
      %v937 = vshll.u32 %v603, 16
      %v939 = vrot.slane %v937, 1
      %v940 = vor.u32 %v935, %v939
      %v942 = vshrl.u32 %v604, 16
      %v944 = vshll.u32 %v604, 16
      %v946 = vrot.slane %v944, 1
      %v947 = vor.u32 %v942, %v946
      %v949 = vshrl.u32 %v605, 16
      %v951 = vshll.u32 %v605, 16
      %v953 = vrot.slane %v951, 1
      %v954 = vor.u32 %v949, %v953
      %v956 = vshrl.u32 %v606, 16
      %v958 = vshll.u32 %v606, 16
      %v960 = vrot.slane %v958, 1
      %v961 = vor.u32 %v956, %v960
      %v963 = vshrl.u32 %v607, 16
      %v965 = vshll.u32 %v607, 16
      %v967 = vrot.slane %v965, 1
      %v968 = vor.u32 %v963, %v967
      %v970 = vshrl.u32 %v608, 16
      %v972 = vshll.u32 %v608, 16
      %v974 = vrot.slane %v972, 1
      %v975 = vor.u32 %v970, %v974
      %v977 = vshrl.u32 %v609, 16
      %v979 = vshll.u32 %v609, 16
      %v981 = vrot.slane %v979, 1
      %v982 = vor.u32 %v977, %v981
      %v984 = vshrl.u32 %v610, 16
      %v986 = vshll.u32 %v610, 16
      %v988 = vrot.slane %v986, 1
      %v989 = vor.u32 %v984, %v988
      %v991 = vshrl.u32 %v611, 16
      %v993 = vshll.u32 %v611, 16
      %v995 = vrot.slane %v993, 1
      %v996 = vor.u32 %v991, %v995
      %997 = vrot.lane.b32.xlu0 %v891, 16
      %v998 = vpop.permute.xlu0 %997
      %999 = vrot.lane.b32.xlu0 %v898, 16
      %v1000 = vpop.permute.xlu0 %999
      %1001 = vrot.lane.b32.xlu0 %v905, 16
      %v1002 = vpop.permute.xlu0 %1001
      %1003 = vrot.lane.b32.xlu0 %v912, 16
      %v1004 = vpop.permute.xlu0 %1003
      %1005 = vrot.lane.b32.xlu0 %v919, 16
      %v1006 = vpop.permute.xlu0 %1005
      %1007 = vrot.lane.b32.xlu0 %v926, 16
      %v1008 = vpop.permute.xlu0 %1007
      %1009 = vrot.lane.b32.xlu0 %v933, 16
      %v1010 = vpop.permute.xlu0 %1009
      %1011 = vrot.lane.b32.xlu0 %v940, 16
      %v1012 = vpop.permute.xlu0 %1011
      %1013 = vrot.lane.b32.xlu0 %v947, 16
      %v1014 = vpop.permute.xlu0 %1013
      %1015 = vrot.lane.b32.xlu0 %v954, 16
      %v1016 = vpop.permute.xlu0 %1015
      %1017 = vrot.lane.b32.xlu0 %v961, 16
      %v1018 = vpop.permute.xlu0 %1017
      %1019 = vrot.lane.b32.xlu0 %v968, 16
      %v1020 = vpop.permute.xlu0 %1019
      %1021 = vrot.lane.b32.xlu0 %v975, 16
      %v1022 = vpop.permute.xlu0 %1021
      %1023 = vrot.lane.b32.xlu0 %v982, 16
      %v1024 = vpop.permute.xlu0 %1023
      %1025 = vrot.lane.b32.xlu0 %v989, 16
      %v1026 = vpop.permute.xlu0 %1025
      %1027 = vrot.lane.b32.xlu0 %v996, 16
      %v1028 = vpop.permute.xlu0 %1027
      %v1030 = vshrl.u32 %v821, 16
      %v1032 = vshll.u32 %v821, 16
      %v1034 = vrot.slane %v1032, 1
      %v1035 = vor.u32 %v1030, %v1034
      %v1037 = vshrl.u32 %v822, 16
      %v1039 = vshll.u32 %v822, 16
      %v1041 = vrot.slane %v1039, 1
      %v1042 = vor.u32 %v1037, %v1041
      %v1044 = vshrl.u32 %v823, 16
      %v1046 = vshll.u32 %v823, 16
      %v1048 = vrot.slane %v1046, 1
      %v1049 = vor.u32 %v1044, %v1048
      %v1051 = vshrl.u32 %v824, 16
      %v1053 = vshll.u32 %v824, 16
      %v1055 = vrot.slane %v1053, 1
      %v1056 = vor.u32 %v1051, %v1055
      %v1058 = vshrl.u32 %v825, 16
      %v1060 = vshll.u32 %v825, 16
      %v1062 = vrot.slane %v1060, 1
      %v1063 = vor.u32 %v1058, %v1062
      %v1065 = vshrl.u32 %v826, 16
      %v1067 = vshll.u32 %v826, 16
      %v1069 = vrot.slane %v1067, 1
      %v1070 = vor.u32 %v1065, %v1069
      %v1072 = vshrl.u32 %v827, 16
      %v1074 = vshll.u32 %v827, 16
      %v1076 = vrot.slane %v1074, 1
      %v1077 = vor.u32 %v1072, %v1076
      %v1079 = vshrl.u32 %v828, 16
      %v1081 = vshll.u32 %v828, 16
      %v1083 = vrot.slane %v1081, 1
      %v1084 = vor.u32 %v1079, %v1083
      %v1086 = vshrl.u32 %v829, 16
      %v1088 = vshll.u32 %v829, 16
      %v1090 = vrot.slane %v1088, 1
      %v1091 = vor.u32 %v1086, %v1090
      %v1093 = vshrl.u32 %v830, 16
      %v1095 = vshll.u32 %v830, 16
      %v1097 = vrot.slane %v1095, 1
      %v1098 = vor.u32 %v1093, %v1097
      %v1100 = vshrl.u32 %v831, 16
      %v1102 = vshll.u32 %v831, 16
      %v1104 = vrot.slane %v1102, 1
      %v1105 = vor.u32 %v1100, %v1104
      %v1107 = vshrl.u32 %v832, 16
      %v1109 = vshll.u32 %v832, 16
      %v1111 = vrot.slane %v1109, 1
      %v1112 = vor.u32 %v1107, %v1111
      %v1114 = vshrl.u32 %v833, 16
      %v1116 = vshll.u32 %v833, 16
      %v1118 = vrot.slane %v1116, 1
      %v1119 = vor.u32 %v1114, %v1118
      %v1121 = vshrl.u32 %v834, 16
      %v1123 = vshll.u32 %v834, 16
      %v1125 = vrot.slane %v1123, 1
      %v1126 = vor.u32 %v1121, %v1125
      %v1128 = vshrl.u32 %v835, 16
      %v1130 = vshll.u32 %v835, 16
      %v1132 = vrot.slane %v1130, 1
      %v1133 = vor.u32 %v1128, %v1132
      %1134 = vrot.lane.b32.xlu0 %v891, 24
      %v1135 = vpop.permute.xlu0 %1134
      %1136 = vrot.lane.b32.xlu0 %v1035, 24
      %v1137 = vpop.permute.xlu0 %1136
      %1138 = vrot.lane.b32.xlu0 %v1042, 24
      %v1139 = vpop.permute.xlu0 %1138
      %1140 = vrot.lane.b32.xlu0 %v1049, 24
      %v1141 = vpop.permute.xlu0 %1140
      %1142 = vrot.lane.b32.xlu0 %v1056, 24
      %v1143 = vpop.permute.xlu0 %1142
      %1144 = vrot.lane.b32.xlu0 %v1063, 24
      %v1145 = vpop.permute.xlu0 %1144
      %1146 = vrot.lane.b32.xlu0 %v1070, 24
      %v1147 = vpop.permute.xlu0 %1146
      %1148 = vrot.lane.b32.xlu0 %v1077, 24
      %v1149 = vpop.permute.xlu0 %1148
      %1150 = vrot.lane.b32.xlu0 %v1084, 24
      %v1151 = vpop.permute.xlu0 %1150
      %1152 = vrot.lane.b32.xlu0 %v1091, 24
      %v1153 = vpop.permute.xlu0 %1152
      %1154 = vrot.lane.b32.xlu0 %v1098, 24
      %v1155 = vpop.permute.xlu0 %1154
      %1156 = vrot.lane.b32.xlu0 %v1105, 24
      %v1157 = vpop.permute.xlu0 %1156
      %1158 = vrot.lane.b32.xlu0 %v1112, 24
      %v1159 = vpop.permute.xlu0 %1158
      %1160 = vrot.lane.b32.xlu0 %v1119, 24
      %v1161 = vpop.permute.xlu0 %1160
      %1162 = vrot.lane.b32.xlu0 %v1126, 24
      %v1163 = vpop.permute.xlu0 %1162
      %1164 = vrot.lane.b32.xlu0 %v1133, 24
      %v1165 = vpop.permute.xlu0 %1164
      %v1181 = vrot.slane 0, 1
      %v1182 = vrot.slane %v597, 1
      %v1183 = vrot.slane %v598, 1
      %v1184 = vrot.slane %v599, 1
      %v1185 = vrot.slane %v600, 1
      %v1186 = vrot.slane %v601, 1
      %v1187 = vrot.slane %v602, 1
      %v1188 = vrot.slane %v603, 1
      %v1189 = vrot.slane %v604, 1
      %v1190 = vrot.slane %v605, 1
      %v1191 = vrot.slane %v606, 1
      %v1192 = vrot.slane %v607, 1
      %v1193 = vrot.slane %v608, 1
      %v1194 = vrot.slane %v609, 1
      %v1195 = vrot.slane %v610, 1
      %v1196 = vrot.slane %v611, 1
      %1197 = vrot.lane.b32.xlu0 %v1181, 32
      %v1198 = vpop.permute.xlu0 %1197
      %1199 = vrot.lane.b32.xlu0 %v1182, 32
      %v1200 = vpop.permute.xlu0 %1199
      %1201 = vrot.lane.b32.xlu0 %v1183, 32
      %v1202 = vpop.permute.xlu0 %1201
      %1203 = vrot.lane.b32.xlu0 %v1184, 32
      %v1204 = vpop.permute.xlu0 %1203
      %1205 = vrot.lane.b32.xlu0 %v1185, 32
      %v1206 = vpop.permute.xlu0 %1205
      %1207 = vrot.lane.b32.xlu0 %v1186, 32
      %v1208 = vpop.permute.xlu0 %1207
      %1209 = vrot.lane.b32.xlu0 %v1187, 32
      %v1210 = vpop.permute.xlu0 %1209
      %1211 = vrot.lane.b32.xlu0 %v1188, 32
      %v1212 = vpop.permute.xlu0 %1211
      %1213 = vrot.lane.b32.xlu0 %v1189, 32
      %v1214 = vpop.permute.xlu0 %1213
      %1215 = vrot.lane.b32.xlu0 %v1190, 32
      %v1216 = vpop.permute.xlu0 %1215
      %1217 = vrot.lane.b32.xlu0 %v1191, 32
      %v1218 = vpop.permute.xlu0 %1217
      %1219 = vrot.lane.b32.xlu0 %v1192, 32
      %v1220 = vpop.permute.xlu0 %1219
      %1221 = vrot.lane.b32.xlu0 %v1193, 32
      %v1222 = vpop.permute.xlu0 %1221
      %1223 = vrot.lane.b32.xlu0 %v1194, 32
      %v1224 = vpop.permute.xlu0 %1223
      %1225 = vrot.lane.b32.xlu0 %v1195, 32
      %v1226 = vpop.permute.xlu0 %1225
      %1227 = vrot.lane.b32.xlu0 %v1196, 32
      %v1228 = vpop.permute.xlu0 %1227
      %v1229 = vrot.slane %v821, 1
      %v1230 = vrot.slane %v822, 1
      %v1231 = vrot.slane %v823, 1
      %v1232 = vrot.slane %v824, 1
      %v1233 = vrot.slane %v825, 1
      %v1234 = vrot.slane %v826, 1
      %v1235 = vrot.slane %v827, 1
      %v1236 = vrot.slane %v828, 1
      %v1237 = vrot.slane %v829, 1
      %v1238 = vrot.slane %v830, 1
      %v1239 = vrot.slane %v831, 1
      %v1240 = vrot.slane %v832, 1
      %v1241 = vrot.slane %v833, 1
      %v1242 = vrot.slane %v834, 1
      %v1243 = vrot.slane %v835, 1
      %1244 = vrot.lane.b32.xlu0 %v1181, 40
      %v1245 = vpop.permute.xlu0 %1244
      %1246 = vrot.lane.b32.xlu0 %v1229, 40
      %v1247 = vpop.permute.xlu0 %1246
      %1248 = vrot.lane.b32.xlu0 %v1230, 40
      %v1249 = vpop.permute.xlu0 %1248
      %1250 = vrot.lane.b32.xlu0 %v1231, 40
      %v1251 = vpop.permute.xlu0 %1250
      %1252 = vrot.lane.b32.xlu0 %v1232, 40
      %v1253 = vpop.permute.xlu0 %1252
      %1254 = vrot.lane.b32.xlu0 %v1233, 40
      %v1255 = vpop.permute.xlu0 %1254
      %1256 = vrot.lane.b32.xlu0 %v1234, 40
      %v1257 = vpop.permute.xlu0 %1256
      %1258 = vrot.lane.b32.xlu0 %v1235, 40
      %v1259 = vpop.permute.xlu0 %1258
      %1260 = vrot.lane.b32.xlu0 %v1236, 40
      %v1261 = vpop.permute.xlu0 %1260
      %1262 = vrot.lane.b32.xlu0 %v1237, 40
      %v1263 = vpop.permute.xlu0 %1262
      %1264 = vrot.lane.b32.xlu0 %v1238, 40
      %v1265 = vpop.permute.xlu0 %1264
      %1266 = vrot.lane.b32.xlu0 %v1239, 40
      %v1267 = vpop.permute.xlu0 %1266
      %1268 = vrot.lane.b32.xlu0 %v1240, 40
      %v1269 = vpop.permute.xlu0 %1268
      %1270 = vrot.lane.b32.xlu0 %v1241, 40
      %v1271 = vpop.permute.xlu0 %1270
      %1272 = vrot.lane.b32.xlu0 %v1242, 40
      %v1273 = vpop.permute.xlu0 %1272
      %1274 = vrot.lane.b32.xlu0 %v1243, 40
      %v1275 = vpop.permute.xlu0 %1274
      %1277 = vrot.lane.b32.xlu0 %v597, 48
      %v1278 = vpop.permute.xlu0 %1277
      %1279 = vrot.lane.b32.xlu0 %v598, 48
      %v1280 = vpop.permute.xlu0 %1279
      %1281 = vrot.lane.b32.xlu0 %v599, 48
      %v1282 = vpop.permute.xlu0 %1281
      %1283 = vrot.lane.b32.xlu0 %v600, 48
      %v1284 = vpop.permute.xlu0 %1283
      %1285 = vrot.lane.b32.xlu0 %v601, 48
      %v1286 = vpop.permute.xlu0 %1285
      %1287 = vrot.lane.b32.xlu0 %v602, 48
      %v1288 = vpop.permute.xlu0 %1287
      %1289 = vrot.lane.b32.xlu0 %v603, 48
      %v1290 = vpop.permute.xlu0 %1289
      %1291 = vrot.lane.b32.xlu0 %v604, 48
      %v1292 = vpop.permute.xlu0 %1291
      %1293 = vrot.lane.b32.xlu0 %v605, 48
      %v1294 = vpop.permute.xlu0 %1293
      %1295 = vrot.lane.b32.xlu0 %v606, 48
      %v1296 = vpop.permute.xlu0 %1295
      %1297 = vrot.lane.b32.xlu0 %v607, 48
      %v1298 = vpop.permute.xlu0 %1297
      %1299 = vrot.lane.b32.xlu0 %v608, 48
      %v1300 = vpop.permute.xlu0 %1299
      %1301 = vrot.lane.b32.xlu0 %v609, 48
      %v1302 = vpop.permute.xlu0 %1301
      %1303 = vrot.lane.b32.xlu0 %v610, 48
      %v1304 = vpop.permute.xlu0 %1303
      %1305 = vrot.lane.b32.xlu0 %v611, 48
      %v1306 = vpop.permute.xlu0 %1305
      %1307 = vrot.lane.b32.xlu0 %v612, 48
      %v1308 = vpop.permute.xlu0 %1307
      %1310 = vrot.lane.b32.xlu0 %v821, 56
      %v1311 = vpop.permute.xlu0 %1310
      %1312 = vrot.lane.b32.xlu0 %v822, 56
      %v1313 = vpop.permute.xlu0 %1312
      %1314 = vrot.lane.b32.xlu0 %v823, 56
      %v1315 = vpop.permute.xlu0 %1314
      %1316 = vrot.lane.b32.xlu0 %v824, 56
      %v1317 = vpop.permute.xlu0 %1316
      %1318 = vrot.lane.b32.xlu0 %v825, 56
      %v1319 = vpop.permute.xlu0 %1318
      %1320 = vrot.lane.b32.xlu0 %v826, 56
      %v1321 = vpop.permute.xlu0 %1320
      %1322 = vrot.lane.b32.xlu0 %v827, 56
      %v1323 = vpop.permute.xlu0 %1322
      %1324 = vrot.lane.b32.xlu0 %v828, 56
      %v1325 = vpop.permute.xlu0 %1324
      %1326 = vrot.lane.b32.xlu0 %v829, 56
      %v1327 = vpop.permute.xlu0 %1326
      %1328 = vrot.lane.b32.xlu0 %v830, 56
      %v1329 = vpop.permute.xlu0 %1328
      %1330 = vrot.lane.b32.xlu0 %v831, 56
      %v1331 = vpop.permute.xlu0 %1330
      %1332 = vrot.lane.b32.xlu0 %v832, 56
      %v1333 = vpop.permute.xlu0 %1332
      %1334 = vrot.lane.b32.xlu0 %v833, 56
      %v1335 = vpop.permute.xlu0 %1334
      %1336 = vrot.lane.b32.xlu0 %v834, 56
      %v1337 = vpop.permute.xlu0 %1336
      %1338 = vrot.lane.b32.xlu0 %v835, 56
      %v1339 = vpop.permute.xlu0 %1338
      %1340 = vrot.lane.b32.xlu0 %v836, 56
      %v1341 = vpop.permute.xlu0 %1340
      %v1343 = vshrl.u32 %v612, 16
      %v1345 = vshll.u32 %v612, 16
      %v1347 = vrot.slane %v1345, 1
      %v1348 = vor.u32 %v1343, %v1347
      %1349 = vrot.lane.b32.xlu0 %v898, 64
      %v1350 = vpop.permute.xlu0 %1349
      %1351 = vrot.lane.b32.xlu0 %v905, 64
      %v1352 = vpop.permute.xlu0 %1351
      %1353 = vrot.lane.b32.xlu0 %v912, 64
      %v1354 = vpop.permute.xlu0 %1353
      %1355 = vrot.lane.b32.xlu0 %v919, 64
      %v1356 = vpop.permute.xlu0 %1355
      %1357 = vrot.lane.b32.xlu0 %v926, 64
      %v1358 = vpop.permute.xlu0 %1357
      %1359 = vrot.lane.b32.xlu0 %v933, 64
      %v1360 = vpop.permute.xlu0 %1359
      %1361 = vrot.lane.b32.xlu0 %v940, 64
      %v1362 = vpop.permute.xlu0 %1361
      %1363 = vrot.lane.b32.xlu0 %v947, 64
      %v1364 = vpop.permute.xlu0 %1363
      %1365 = vrot.lane.b32.xlu0 %v954, 64
      %v1366 = vpop.permute.xlu0 %1365
      %1367 = vrot.lane.b32.xlu0 %v961, 64
      %v1368 = vpop.permute.xlu0 %1367
      %1369 = vrot.lane.b32.xlu0 %v968, 64
      %v1370 = vpop.permute.xlu0 %1369
      %1371 = vrot.lane.b32.xlu0 %v975, 64
      %v1372 = vpop.permute.xlu0 %1371
      %1373 = vrot.lane.b32.xlu0 %v982, 64
      %v1374 = vpop.permute.xlu0 %1373
      %1375 = vrot.lane.b32.xlu0 %v989, 64
      %v1376 = vpop.permute.xlu0 %1375
      %1377 = vrot.lane.b32.xlu0 %v996, 64
      %v1378 = vpop.permute.xlu0 %1377
      %1379 = vrot.lane.b32.xlu0 %v1348, 64
      %v1380 = vpop.permute.xlu0 %1379
      %v1382 = vshrl.u32 %v836, 16
      %v1384 = vshll.u32 %v836, 16
      %v1386 = vrot.slane %v1384, 1
      %v1387 = vor.u32 %v1382, %v1386
      %1388 = vrot.lane.b32.xlu0 %v1035, 72
      %v1389 = vpop.permute.xlu0 %1388
      %1390 = vrot.lane.b32.xlu0 %v1042, 72
      %v1391 = vpop.permute.xlu0 %1390
      %1392 = vrot.lane.b32.xlu0 %v1049, 72
      %v1393 = vpop.permute.xlu0 %1392
      %1394 = vrot.lane.b32.xlu0 %v1056, 72
      %v1395 = vpop.permute.xlu0 %1394
      %1396 = vrot.lane.b32.xlu0 %v1063, 72
      %v1397 = vpop.permute.xlu0 %1396
      %1398 = vrot.lane.b32.xlu0 %v1070, 72
      %v1399 = vpop.permute.xlu0 %1398
      %1400 = vrot.lane.b32.xlu0 %v1077, 72
      %v1401 = vpop.permute.xlu0 %1400
      %1402 = vrot.lane.b32.xlu0 %v1084, 72
      %v1403 = vpop.permute.xlu0 %1402
      %1404 = vrot.lane.b32.xlu0 %v1091, 72
      %v1405 = vpop.permute.xlu0 %1404
      %1406 = vrot.lane.b32.xlu0 %v1098, 72
      %v1407 = vpop.permute.xlu0 %1406
      %1408 = vrot.lane.b32.xlu0 %v1105, 72
      %v1409 = vpop.permute.xlu0 %1408
      %1410 = vrot.lane.b32.xlu0 %v1112, 72
      %v1411 = vpop.permute.xlu0 %1410
      %1412 = vrot.lane.b32.xlu0 %v1119, 72
      %v1413 = vpop.permute.xlu0 %1412
      %1414 = vrot.lane.b32.xlu0 %v1126, 72
      %v1415 = vpop.permute.xlu0 %1414
      %1416 = vrot.lane.b32.xlu0 %v1133, 72
      %v1417 = vpop.permute.xlu0 %1416
      %1418 = vrot.lane.b32.xlu0 %v1387, 72
      %v1419 = vpop.permute.xlu0 %1418
      %v1420 = vrot.slane %v612, 1
      %1421 = vrot.lane.b32.xlu0 %v1182, 80
      %v1422 = vpop.permute.xlu0 %1421
      %1423 = vrot.lane.b32.xlu0 %v1183, 80
      %v1424 = vpop.permute.xlu0 %1423
      %1425 = vrot.lane.b32.xlu0 %v1184, 80
      %v1426 = vpop.permute.xlu0 %1425
      %1427 = vrot.lane.b32.xlu0 %v1185, 80
      %v1428 = vpop.permute.xlu0 %1427
      %1429 = vrot.lane.b32.xlu0 %v1186, 80
      %v1430 = vpop.permute.xlu0 %1429
      %1431 = vrot.lane.b32.xlu0 %v1187, 80
      %v1432 = vpop.permute.xlu0 %1431
      %1433 = vrot.lane.b32.xlu0 %v1188, 80
      %v1434 = vpop.permute.xlu0 %1433
      %1435 = vrot.lane.b32.xlu0 %v1189, 80
      %v1436 = vpop.permute.xlu0 %1435
      %1437 = vrot.lane.b32.xlu0 %v1190, 80
      %v1438 = vpop.permute.xlu0 %1437
      %1439 = vrot.lane.b32.xlu0 %v1191, 80
      %v1440 = vpop.permute.xlu0 %1439
      %1441 = vrot.lane.b32.xlu0 %v1192, 80
      %v1442 = vpop.permute.xlu0 %1441
      %1443 = vrot.lane.b32.xlu0 %v1193, 80
      %v1444 = vpop.permute.xlu0 %1443
      %1445 = vrot.lane.b32.xlu0 %v1194, 80
      %v1446 = vpop.permute.xlu0 %1445
      %1447 = vrot.lane.b32.xlu0 %v1195, 80
      %v1448 = vpop.permute.xlu0 %1447
      %1449 = vrot.lane.b32.xlu0 %v1196, 80
      %v1450 = vpop.permute.xlu0 %1449
      %1451 = vrot.lane.b32.xlu0 %v1420, 80
      %v1452 = vpop.permute.xlu0 %1451
      %v1453 = vrot.slane %v836, 1
      %1454 = vrot.lane.b32.xlu0 %v1229, 88
      %v1455 = vpop.permute.xlu0 %1454
      %1456 = vrot.lane.b32.xlu0 %v1230, 88
      %v1457 = vpop.permute.xlu0 %1456
      %1458 = vrot.lane.b32.xlu0 %v1231, 88
      %v1459 = vpop.permute.xlu0 %1458
      %1460 = vrot.lane.b32.xlu0 %v1232, 88
      %v1461 = vpop.permute.xlu0 %1460
      %1462 = vrot.lane.b32.xlu0 %v1233, 88
      %v1463 = vpop.permute.xlu0 %1462
      %1464 = vrot.lane.b32.xlu0 %v1234, 88
      %v1465 = vpop.permute.xlu0 %1464
      %1466 = vrot.lane.b32.xlu0 %v1235, 88
      %v1467 = vpop.permute.xlu0 %1466
      %1468 = vrot.lane.b32.xlu0 %v1236, 88
      %v1469 = vpop.permute.xlu0 %1468
      %1470 = vrot.lane.b32.xlu0 %v1237, 88
      %v1471 = vpop.permute.xlu0 %1470
      %1472 = vrot.lane.b32.xlu0 %v1238, 88
      %v1473 = vpop.permute.xlu0 %1472
      %1474 = vrot.lane.b32.xlu0 %v1239, 88
      %v1475 = vpop.permute.xlu0 %1474
      %1476 = vrot.lane.b32.xlu0 %v1240, 88
      %v1477 = vpop.permute.xlu0 %1476
      %1478 = vrot.lane.b32.xlu0 %v1241, 88
      %v1479 = vpop.permute.xlu0 %1478
      %1480 = vrot.lane.b32.xlu0 %v1242, 88
      %v1481 = vpop.permute.xlu0 %1480
      %1482 = vrot.lane.b32.xlu0 %v1243, 88
      %v1483 = vpop.permute.xlu0 %1482
      %1484 = vrot.lane.b32.xlu0 %v1453, 88
      %v1485 = vpop.permute.xlu0 %1484
      %1486 = vrot.lane.b32.xlu0 %v598, 96
      %v1487 = vpop.permute.xlu0 %1486
      %1488 = vrot.lane.b32.xlu0 %v599, 96
      %v1489 = vpop.permute.xlu0 %1488
      %1490 = vrot.lane.b32.xlu0 %v600, 96
      %v1491 = vpop.permute.xlu0 %1490
      %1492 = vrot.lane.b32.xlu0 %v601, 96
      %v1493 = vpop.permute.xlu0 %1492
      %1494 = vrot.lane.b32.xlu0 %v602, 96
      %v1495 = vpop.permute.xlu0 %1494
      %1496 = vrot.lane.b32.xlu0 %v603, 96
      %v1497 = vpop.permute.xlu0 %1496
      %1498 = vrot.lane.b32.xlu0 %v604, 96
      %v1499 = vpop.permute.xlu0 %1498
      %1500 = vrot.lane.b32.xlu0 %v605, 96
      %v1501 = vpop.permute.xlu0 %1500
      %1502 = vrot.lane.b32.xlu0 %v606, 96
      %v1503 = vpop.permute.xlu0 %1502
      %1504 = vrot.lane.b32.xlu0 %v607, 96
      %v1505 = vpop.permute.xlu0 %1504
      %1506 = vrot.lane.b32.xlu0 %v608, 96
      %v1507 = vpop.permute.xlu0 %1506
      %1508 = vrot.lane.b32.xlu0 %v609, 96
      %v1509 = vpop.permute.xlu0 %1508
      %1510 = vrot.lane.b32.xlu0 %v610, 96
      %v1511 = vpop.permute.xlu0 %1510
      %1512 = vrot.lane.b32.xlu0 %v611, 96
      %v1513 = vpop.permute.xlu0 %1512
      %1514 = vrot.lane.b32.xlu0 %v612, 96
      %v1515 = vpop.permute.xlu0 %1514
      %1516 = vrot.lane.b32.xlu0 0, 96
      %v1517 = vpop.permute.xlu0 %1516
      %1518 = vrot.lane.b32.xlu0 %v822, 104
      %v1519 = vpop.permute.xlu0 %1518
      %1520 = vrot.lane.b32.xlu0 %v823, 104
      %v1521 = vpop.permute.xlu0 %1520
      %1522 = vrot.lane.b32.xlu0 %v824, 104
      %v1523 = vpop.permute.xlu0 %1522
      %1524 = vrot.lane.b32.xlu0 %v825, 104
      %v1525 = vpop.permute.xlu0 %1524
      %1526 = vrot.lane.b32.xlu0 %v826, 104
      %v1527 = vpop.permute.xlu0 %1526
      %1528 = vrot.lane.b32.xlu0 %v827, 104
      %v1529 = vpop.permute.xlu0 %1528
      %1530 = vrot.lane.b32.xlu0 %v828, 104
      %v1531 = vpop.permute.xlu0 %1530
      %1532 = vrot.lane.b32.xlu0 %v829, 104
      %v1533 = vpop.permute.xlu0 %1532
      %1534 = vrot.lane.b32.xlu0 %v830, 104
      %v1535 = vpop.permute.xlu0 %1534
      %1536 = vrot.lane.b32.xlu0 %v831, 104
      %v1537 = vpop.permute.xlu0 %1536
      %1538 = vrot.lane.b32.xlu0 %v832, 104
      %v1539 = vpop.permute.xlu0 %1538
      %1540 = vrot.lane.b32.xlu0 %v833, 104
      %v1541 = vpop.permute.xlu0 %1540
      %1542 = vrot.lane.b32.xlu0 %v834, 104
      %v1543 = vpop.permute.xlu0 %1542
      %1544 = vrot.lane.b32.xlu0 %v835, 104
      %v1545 = vpop.permute.xlu0 %1544
      %1546 = vrot.lane.b32.xlu0 %v836, 104
      %v1547 = vpop.permute.xlu0 %1546
      %1548 = vrot.lane.b32.xlu0 0, 104
      %v1549 = vpop.permute.xlu0 %1548
      %1550 = vrot.lane.b32.xlu0 %v905, 112
      %v1551 = vpop.permute.xlu0 %1550
      %1552 = vrot.lane.b32.xlu0 %v912, 112
      %v1553 = vpop.permute.xlu0 %1552
      %1554 = vrot.lane.b32.xlu0 %v919, 112
      %v1555 = vpop.permute.xlu0 %1554
      %1556 = vrot.lane.b32.xlu0 %v926, 112
      %v1557 = vpop.permute.xlu0 %1556
      %1558 = vrot.lane.b32.xlu0 %v933, 112
      %v1559 = vpop.permute.xlu0 %1558
      %1560 = vrot.lane.b32.xlu0 %v940, 112
      %v1561 = vpop.permute.xlu0 %1560
      %1562 = vrot.lane.b32.xlu0 %v947, 112
      %v1563 = vpop.permute.xlu0 %1562
      %1564 = vrot.lane.b32.xlu0 %v954, 112
      %v1565 = vpop.permute.xlu0 %1564
      %1566 = vrot.lane.b32.xlu0 %v961, 112
      %v1567 = vpop.permute.xlu0 %1566
      %1568 = vrot.lane.b32.xlu0 %v968, 112
      %v1569 = vpop.permute.xlu0 %1568
      %1570 = vrot.lane.b32.xlu0 %v975, 112
      %v1571 = vpop.permute.xlu0 %1570
      %1572 = vrot.lane.b32.xlu0 %v982, 112
      %v1573 = vpop.permute.xlu0 %1572
      %1574 = vrot.lane.b32.xlu0 %v989, 112
      %v1575 = vpop.permute.xlu0 %1574
      %1576 = vrot.lane.b32.xlu0 %v996, 112
      %v1577 = vpop.permute.xlu0 %1576
      %1578 = vrot.lane.b32.xlu0 %v1348, 112
      %v1579 = vpop.permute.xlu0 %1578
      %1580 = vrot.lane.b32.xlu0 %v891, 112
      %v1581 = vpop.permute.xlu0 %1580
      %1582 = vrot.lane.b32.xlu0 %v1042, 120
      %v1583 = vpop.permute.xlu0 %1582
      %1584 = vrot.lane.b32.xlu0 %v1049, 120
      %v1585 = vpop.permute.xlu0 %1584
      %1586 = vrot.lane.b32.xlu0 %v1056, 120
      %v1587 = vpop.permute.xlu0 %1586
      %1588 = vrot.lane.b32.xlu0 %v1063, 120
      %v1589 = vpop.permute.xlu0 %1588
      %1590 = vrot.lane.b32.xlu0 %v1070, 120
      %v1591 = vpop.permute.xlu0 %1590
      %1592 = vrot.lane.b32.xlu0 %v1077, 120
      %v1593 = vpop.permute.xlu0 %1592
      %1594 = vrot.lane.b32.xlu0 %v1084, 120
      %v1595 = vpop.permute.xlu0 %1594
      %1596 = vrot.lane.b32.xlu0 %v1091, 120
      %v1597 = vpop.permute.xlu0 %1596
      %1598 = vrot.lane.b32.xlu0 %v1098, 120
      %v1599 = vpop.permute.xlu0 %1598
      %1600 = vrot.lane.b32.xlu0 %v1105, 120
      %v1601 = vpop.permute.xlu0 %1600
      %1602 = vrot.lane.b32.xlu0 %v1112, 120
      %v1603 = vpop.permute.xlu0 %1602
      %1604 = vrot.lane.b32.xlu0 %v1119, 120
      %v1605 = vpop.permute.xlu0 %1604
      %1606 = vrot.lane.b32.xlu0 %v1126, 120
      %v1607 = vpop.permute.xlu0 %1606
      %1608 = vrot.lane.b32.xlu0 %v1133, 120
      %v1609 = vpop.permute.xlu0 %1608
      %1610 = vrot.lane.b32.xlu0 %v1387, 120
      %v1611 = vpop.permute.xlu0 %1610
      %1612 = vrot.lane.b32.xlu0 %v891, 120
      %v1613 = vpop.permute.xlu0 %1612
      %v1615 = vsel %vm309, 0, %v854
      %v1617 = vsel %vm309, %v597, %v856
      %v1619 = vsel %vm309, %v598, %v858
      %v1621 = vsel %vm309, %v599, %v860
      %v1623 = vsel %vm309, %v600, %v862
      %v1625 = vsel %vm309, %v601, %v864
      %v1627 = vsel %vm309, %v602, %v866
      %v1629 = vsel %vm309, %v603, %v868
      %v1631 = vsel %vm309, %v604, %v870
      %v1633 = vsel %vm309, %v605, %v872
      %v1635 = vsel %vm309, %v606, %v874
      %v1637 = vsel %vm309, %v607, %v876
      %v1639 = vsel %vm309, %v608, %v878
      %v1641 = vsel %vm309, %v609, %v880
      %v1643 = vsel %vm309, %v610, %v882
      %v1645 = vsel %vm309, %v611, %v884
      %vm1646 = vcmask 130048
      %v1648 = vsel %vm1646, %v1615, %v998
      %v1650 = vsel %vm1646, %v1617, %v1000
      %v1652 = vsel %vm1646, %v1619, %v1002
      %v1654 = vsel %vm1646, %v1621, %v1004
      %v1656 = vsel %vm1646, %v1623, %v1006
      %v1658 = vsel %vm1646, %v1625, %v1008
      %v1660 = vsel %vm1646, %v1627, %v1010
      %v1662 = vsel %vm1646, %v1629, %v1012
      %v1664 = vsel %vm1646, %v1631, %v1014
      %v1666 = vsel %vm1646, %v1633, %v1016
      %v1668 = vsel %vm1646, %v1635, %v1018
      %v1670 = vsel %vm1646, %v1637, %v1020
      %v1672 = vsel %vm1646, %v1639, %v1022
      %v1674 = vsel %vm1646, %v1641, %v1024
      %v1676 = vsel %vm1646, %v1643, %v1026
      %v1678 = vsel %vm1646, %v1645, %v1028
      %vm1679 = vcmask 195584
      %v1681 = vsel %vm1679, %v1648, %v1135
      %v1683 = vsel %vm1679, %v1650, %v1137
      %v1685 = vsel %vm1679, %v1652, %v1139
      %v1687 = vsel %vm1679, %v1654, %v1141
      %v1689 = vsel %vm1679, %v1656, %v1143
      %v1691 = vsel %vm1679, %v1658, %v1145
      %v1693 = vsel %vm1679, %v1660, %v1147
      %v1695 = vsel %vm1679, %v1662, %v1149
      %v1697 = vsel %vm1679, %v1664, %v1151
      %v1699 = vsel %vm1679, %v1666, %v1153
      %v1701 = vsel %vm1679, %v1668, %v1155
      %v1703 = vsel %vm1679, %v1670, %v1157
      %v1705 = vsel %vm1679, %v1672, %v1159
      %v1707 = vsel %vm1679, %v1674, %v1161
      %v1709 = vsel %vm1679, %v1676, %v1163
      %v1711 = vsel %vm1679, %v1678, %v1165
      %vm1712 = vcmask 261120
      %v1714 = vsel %vm1712, %v1681, %v1198
      %v1716 = vsel %vm1712, %v1683, %v1200
      %v1718 = vsel %vm1712, %v1685, %v1202
      %v1720 = vsel %vm1712, %v1687, %v1204
      %v1722 = vsel %vm1712, %v1689, %v1206
      %v1724 = vsel %vm1712, %v1691, %v1208
      %v1726 = vsel %vm1712, %v1693, %v1210
      %v1728 = vsel %vm1712, %v1695, %v1212
      %v1730 = vsel %vm1712, %v1697, %v1214
      %v1732 = vsel %vm1712, %v1699, %v1216
      %v1734 = vsel %vm1712, %v1701, %v1218
      %v1736 = vsel %vm1712, %v1703, %v1220
      %v1738 = vsel %vm1712, %v1705, %v1222
      %v1740 = vsel %vm1712, %v1707, %v1224
      %v1742 = vsel %vm1712, %v1709, %v1226
      %v1744 = vsel %vm1712, %v1711, %v1228
      %vm1745 = vcmask 326656
      %v1747 = vsel %vm1745, %v1714, %v1245
      %v1749 = vsel %vm1745, %v1716, %v1247
      %v1751 = vsel %vm1745, %v1718, %v1249
      %v1753 = vsel %vm1745, %v1720, %v1251
      %v1755 = vsel %vm1745, %v1722, %v1253
      %v1757 = vsel %vm1745, %v1724, %v1255
      %v1759 = vsel %vm1745, %v1726, %v1257
      %v1761 = vsel %vm1745, %v1728, %v1259
      %v1763 = vsel %vm1745, %v1730, %v1261
      %v1765 = vsel %vm1745, %v1732, %v1263
      %v1767 = vsel %vm1745, %v1734, %v1265
      %v1769 = vsel %vm1745, %v1736, %v1267
      %v1771 = vsel %vm1745, %v1738, %v1269
      %v1773 = vsel %vm1745, %v1740, %v1271
      %v1775 = vsel %vm1745, %v1742, %v1273
      %v1777 = vsel %vm1745, %v1744, %v1275
      %vm1778 = vcmask 392192
      %v1780 = vsel %vm1778, %v1747, %v1278
      %v1782 = vsel %vm1778, %v1749, %v1280
      %v1784 = vsel %vm1778, %v1751, %v1282
      %v1786 = vsel %vm1778, %v1753, %v1284
      %v1788 = vsel %vm1778, %v1755, %v1286
      %v1790 = vsel %vm1778, %v1757, %v1288
      %v1792 = vsel %vm1778, %v1759, %v1290
      %v1794 = vsel %vm1778, %v1761, %v1292
      %v1796 = vsel %vm1778, %v1763, %v1294
      %v1798 = vsel %vm1778, %v1765, %v1296
      %v1800 = vsel %vm1778, %v1767, %v1298
      %v1802 = vsel %vm1778, %v1769, %v1300
      %v1804 = vsel %vm1778, %v1771, %v1302
      %v1806 = vsel %vm1778, %v1773, %v1304
      %v1808 = vsel %vm1778, %v1775, %v1306
      %v1810 = vsel %vm1778, %v1777, %v1308
      %vm1811 = vcmask 457728
      %v1813 = vsel %vm1811, %v1780, %v1311
      %v1815 = vsel %vm1811, %v1782, %v1313
      %v1817 = vsel %vm1811, %v1784, %v1315
      %v1819 = vsel %vm1811, %v1786, %v1317
      %v1821 = vsel %vm1811, %v1788, %v1319
      %v1823 = vsel %vm1811, %v1790, %v1321
      %v1825 = vsel %vm1811, %v1792, %v1323
      %v1827 = vsel %vm1811, %v1794, %v1325
      %v1829 = vsel %vm1811, %v1796, %v1327
      %v1831 = vsel %vm1811, %v1798, %v1329
      %v1833 = vsel %vm1811, %v1800, %v1331
      %v1835 = vsel %vm1811, %v1802, %v1333
      %v1837 = vsel %vm1811, %v1804, %v1335
      %v1839 = vsel %vm1811, %v1806, %v1337
      %v1841 = vsel %vm1811, %v1808, %v1339
      %v1843 = vsel %vm1811, %v1810, %v1341
      %vm1844 = vcmask 523264
      %v1846 = vsel %vm1844, %v1813, %v1350
      %v1848 = vsel %vm1844, %v1815, %v1352
      %v1850 = vsel %vm1844, %v1817, %v1354
      %v1852 = vsel %vm1844, %v1819, %v1356
      %v1854 = vsel %vm1844, %v1821, %v1358
      %v1856 = vsel %vm1844, %v1823, %v1360
      %v1858 = vsel %vm1844, %v1825, %v1362
      %v1860 = vsel %vm1844, %v1827, %v1364
      %v1862 = vsel %vm1844, %v1829, %v1366
      %v1864 = vsel %vm1844, %v1831, %v1368
      %v1866 = vsel %vm1844, %v1833, %v1370
      %v1868 = vsel %vm1844, %v1835, %v1372
      %v1870 = vsel %vm1844, %v1837, %v1374
      %v1872 = vsel %vm1844, %v1839, %v1376
      %v1874 = vsel %vm1844, %v1841, %v1378
      %v1876 = vsel %vm1844, %v1843, %v1380
      %vm1877 = vcmask 588800
      %v1879 = vsel %vm1877, %v1846, %v1389
      %v1881 = vsel %vm1877, %v1848, %v1391
      %v1883 = vsel %vm1877, %v1850, %v1393
      %v1885 = vsel %vm1877, %v1852, %v1395
      %v1887 = vsel %vm1877, %v1854, %v1397
      %v1889 = vsel %vm1877, %v1856, %v1399
      %v1891 = vsel %vm1877, %v1858, %v1401
      %v1893 = vsel %vm1877, %v1860, %v1403
      %v1895 = vsel %vm1877, %v1862, %v1405
      %v1897 = vsel %vm1877, %v1864, %v1407
      %v1899 = vsel %vm1877, %v1866, %v1409
      %v1901 = vsel %vm1877, %v1868, %v1411
      %v1903 = vsel %vm1877, %v1870, %v1413
      %v1905 = vsel %vm1877, %v1872, %v1415
      %v1907 = vsel %vm1877, %v1874, %v1417
      %v1909 = vsel %vm1877, %v1876, %v1419
      %vm1910 = vcmask 654336
      %v1912 = vsel %vm1910, %v1879, %v1422
      %v1914 = vsel %vm1910, %v1881, %v1424
      %v1916 = vsel %vm1910, %v1883, %v1426
      %v1918 = vsel %vm1910, %v1885, %v1428
      %v1920 = vsel %vm1910, %v1887, %v1430
      %v1922 = vsel %vm1910, %v1889, %v1432
      %v1924 = vsel %vm1910, %v1891, %v1434
      %v1926 = vsel %vm1910, %v1893, %v1436
      %v1928 = vsel %vm1910, %v1895, %v1438
      %v1930 = vsel %vm1910, %v1897, %v1440
      %v1932 = vsel %vm1910, %v1899, %v1442
      %v1934 = vsel %vm1910, %v1901, %v1444
      %v1936 = vsel %vm1910, %v1903, %v1446
      %v1938 = vsel %vm1910, %v1905, %v1448
      %v1940 = vsel %vm1910, %v1907, %v1450
      %v1942 = vsel %vm1910, %v1909, %v1452
      %vm1943 = vcmask 719872
      %v1945 = vsel %vm1943, %v1912, %v1455
      %v1947 = vsel %vm1943, %v1914, %v1457
      %v1949 = vsel %vm1943, %v1916, %v1459
      %v1951 = vsel %vm1943, %v1918, %v1461
      %v1953 = vsel %vm1943, %v1920, %v1463
      %v1955 = vsel %vm1943, %v1922, %v1465
      %v1957 = vsel %vm1943, %v1924, %v1467
      %v1959 = vsel %vm1943, %v1926, %v1469
      %v1961 = vsel %vm1943, %v1928, %v1471
      %v1963 = vsel %vm1943, %v1930, %v1473
      %v1965 = vsel %vm1943, %v1932, %v1475
      %v1967 = vsel %vm1943, %v1934, %v1477
      %v1969 = vsel %vm1943, %v1936, %v1479
      %v1971 = vsel %vm1943, %v1938, %v1481
      %v1973 = vsel %vm1943, %v1940, %v1483
      %v1975 = vsel %vm1943, %v1942, %v1485
      %vm1976 = vcmask 785408
      %v1978 = vsel %vm1976, %v1945, %v1487
      %v1980 = vsel %vm1976, %v1947, %v1489
      %v1982 = vsel %vm1976, %v1949, %v1491
      %v1984 = vsel %vm1976, %v1951, %v1493
      %v1986 = vsel %vm1976, %v1953, %v1495
      %v1988 = vsel %vm1976, %v1955, %v1497
      %v1990 = vsel %vm1976, %v1957, %v1499
      %v1992 = vsel %vm1976, %v1959, %v1501
      %v1994 = vsel %vm1976, %v1961, %v1503
      %v1996 = vsel %vm1976, %v1963, %v1505
      %v1998 = vsel %vm1976, %v1965, %v1507
      %v2000 = vsel %vm1976, %v1967, %v1509
      %v2002 = vsel %vm1976, %v1969, %v1511
      %v2004 = vsel %vm1976, %v1971, %v1513
      %v2006 = vsel %vm1976, %v1973, %v1515
      %v2008 = vsel %vm1976, %v1975, %v1517
      %vm2009 = vcmask 850944
      %v2011 = vsel %vm2009, %v1978, %v1519
      %v2013 = vsel %vm2009, %v1980, %v1521
      %v2015 = vsel %vm2009, %v1982, %v1523
      %v2017 = vsel %vm2009, %v1984, %v1525
      %v2019 = vsel %vm2009, %v1986, %v1527
      %v2021 = vsel %vm2009, %v1988, %v1529
      %v2023 = vsel %vm2009, %v1990, %v1531
      %v2025 = vsel %vm2009, %v1992, %v1533
      %v2027 = vsel %vm2009, %v1994, %v1535
      %v2029 = vsel %vm2009, %v1996, %v1537
      %v2031 = vsel %vm2009, %v1998, %v1539
      %v2033 = vsel %vm2009, %v2000, %v1541
      %v2035 = vsel %vm2009, %v2002, %v1543
      %v2037 = vsel %vm2009, %v2004, %v1545
      %v2039 = vsel %vm2009, %v2006, %v1547
      %v2041 = vsel %vm2009, %v2008, %v1549
      %vm2042 = vcmask 916480
      %v2044 = vsel %vm2042, %v2011, %v1551
      %v2046 = vsel %vm2042, %v2013, %v1553
      %v2048 = vsel %vm2042, %v2015, %v1555
      %v2050 = vsel %vm2042, %v2017, %v1557
      %v2052 = vsel %vm2042, %v2019, %v1559
      %v2054 = vsel %vm2042, %v2021, %v1561
      %v2056 = vsel %vm2042, %v2023, %v1563
      %v2058 = vsel %vm2042, %v2025, %v1565
      %v2060 = vsel %vm2042, %v2027, %v1567
      %v2062 = vsel %vm2042, %v2029, %v1569
      %v2064 = vsel %vm2042, %v2031, %v1571
      %v2066 = vsel %vm2042, %v2033, %v1573
      %v2068 = vsel %vm2042, %v2035, %v1575
      %v2070 = vsel %vm2042, %v2037, %v1577
      %v2072 = vsel %vm2042, %v2039, %v1579
      %v2074 = vsel %vm2042, %v2041, %v1581
      %vm2075 = vcmask 982016
      %v2077 = vsel %vm2075, %v2044, %v1583
      %v2079 = vsel %vm2075, %v2046, %v1585
      %v2081 = vsel %vm2075, %v2048, %v1587
      %v2083 = vsel %vm2075, %v2050, %v1589
      %v2085 = vsel %vm2075, %v2052, %v1591
      %v2087 = vsel %vm2075, %v2054, %v1593
      %v2089 = vsel %vm2075, %v2056, %v1595
      %v2091 = vsel %vm2075, %v2058, %v1597
      %v2093 = vsel %vm2075, %v2060, %v1599
      %v2095 = vsel %vm2075, %v2062, %v1601
      %v2097 = vsel %vm2075, %v2064, %v1603
      %v2099 = vsel %vm2075, %v2066, %v1605
      %v2101 = vsel %vm2075, %v2068, %v1607
      %v2103 = vsel %vm2075, %v2070, %v1609
      %v2105 = vsel %vm2075, %v2072, %v1611
      %v2107 = vsel %vm2075, %v2074, %v1613
      %2108 = vrot.lane.b32.xlu0 %v836, 8
      %v2109 = vpop.permute.xlu0 %2108
      %v2111 = vsel %vm309, %v612, %v2109
      %v2128 = vrot.slane %v1619, 1
      %v2129 = vrot.slane %v1621, 1
      %v2130 = vrot.slane %v1623, 1
      %v2131 = vrot.slane %v1625, 1
      %v2132 = vrot.slane %v1627, 1
      %v2133 = vrot.slane %v1629, 1
      %v2134 = vrot.slane %v1631, 1
      %v2135 = vrot.slane %v1633, 1
      %v2136 = vrot.slane %v1635, 1
      %v2137 = vrot.slane %v1637, 1
      %v2138 = vrot.slane %v1639, 1
      %v2139 = vrot.slane %v1641, 1
      %v2140 = vrot.slane %v1643, 1
      %v2141 = vrot.slane %v1645, 1
      %v2142 = vrot.slane %v2111, 1
      %v2143 = vrot.slane %v1615, 1
      %v2160 = vunpack.c.l.b16 %v2077
      %v2161 = vunpack.c.l.b16 %v2128
      %v2162 = vunpack.c.l.b16 %v2079
      %v2163 = vunpack.c.l.b16 %v2129
      %v2164 = vunpack.c.l.b16 %v2081
      %v2165 = vunpack.c.l.b16 %v2130
      %v2166 = vunpack.c.l.b16 %v2083
      %v2167 = vunpack.c.l.b16 %v2131
      %v2168 = vunpack.c.l.b16 %v2085
      %v2169 = vunpack.c.l.b16 %v2132
      %v2170 = vunpack.c.l.b16 %v2087
      %v2171 = vunpack.c.l.b16 %v2133
      %v2172 = vunpack.c.l.b16 %v2089
      %v2173 = vunpack.c.l.b16 %v2134
      %v2174 = vunpack.c.l.b16 %v2091
      %v2175 = vunpack.c.l.b16 %v2135
      %v2176 = vunpack.c.l.b16 %v2093
      %v2177 = vunpack.c.l.b16 %v2136
      %v2178 = vunpack.c.l.b16 %v2095
      %v2179 = vunpack.c.l.b16 %v2137
      %v2180 = vunpack.c.l.b16 %v2097
      %v2181 = vunpack.c.l.b16 %v2138
      %v2182 = vunpack.c.l.b16 %v2099
      %v2183 = vunpack.c.l.b16 %v2139
      %v2184 = vunpack.c.l.b16 %v2101
      %v2185 = vunpack.c.l.b16 %v2140
      %v2186 = vunpack.c.l.b16 %v2103
      %v2187 = vunpack.c.l.b16 %v2141
      %v2188 = vunpack.c.l.b16 %v2105
      %v2189 = vunpack.c.l.b16 %v2142
      %v2190 = vunpack.c.l.b16 %v2107
      %v2191 = vunpack.c.l.b16 %v2143
      %v2192 = vld [vmem:[%s4] sm:$0xf]
      %v2193 = vld [vmem:[%s4 + $0x4] sm:$0xf]
      %v2194 = vld [vmem:[%s4 + $0x8] sm:$0xf]
      %v2195 = vld [vmem:[%s4 + $0xc] sm:$0xf]
      %v2196 = vld [vmem:[%s4 + $0x10] sm:$0xf]
      %v2197 = vld [vmem:[%s4 + $0x14] sm:$0xf]
      %v2198 = vld [vmem:[%s4 + $0x18] sm:$0xf]
      %v2199 = vld [vmem:[%s4 + $0x1c] sm:$0xf]
      %v2200 = vld [vmem:[%s4 + $0x20] sm:$0xf]
      %v2201 = vld [vmem:[%s4 + $0x24] sm:$0xf]
      %v2202 = vld [vmem:[%s4 + $0x28] sm:$0xf]
      %v2203 = vld [vmem:[%s4 + $0x2c] sm:$0xf]
      %v2204 = vld [vmem:[%s4 + $0x30] sm:$0xf]
      %v2205 = vld [vmem:[%s4 + $0x34] sm:$0xf]
      %v2206 = vld [vmem:[%s4 + $0x38] sm:$0xf]
      %v2207 = vld [vmem:[%s4 + $0x3c] sm:$0xf]
      %v2208 = vld [vmem:[%s4 + $0x40] sm:$0xf]
      %v2209 = vld [vmem:[%s4 + $0x44] sm:$0xf]
      %v2210 = vld [vmem:[%s5] sm:$0x1]
      %v2212 = vlaneseq
      %v2213 = vshrl.u32 %v2212, 7
      %v2214 = vsub.s32 0, %v2213
      %v2215 = vrot.slane %v2210, %v2214
      %v2217 = vpack.c.b16 %v2162, %v2160
      %v2218 = vpack.c.b16 %v2163, %v2161
      %v2219 = vpack.c.b16 %v2166, %v2164
      %v2220 = vpack.c.b16 %v2167, %v2165
      %v2221 = vpack.c.b16 %v2170, %v2168
      %v2222 = vpack.c.b16 %v2171, %v2169
      %v2223 = vpack.c.b16 %v2174, %v2172
      %v2224 = vpack.c.b16 %v2175, %v2173
      %v2225 = vpack.c.b16 %v2178, %v2176
      %v2226 = vpack.c.b16 %v2179, %v2177
      %v2227 = vpack.c.b16 %v2182, %v2180
      %v2228 = vpack.c.b16 %v2183, %v2181
      %v2229 = vpack.c.b16 %v2186, %v2184
      %v2230 = vpack.c.b16 %v2187, %v2185
      %v2231 = vpack.c.b16 %v2190, %v2188
      %v2232 = vpack.c.b16 %v2191, %v2189
      %v2259 = vunpack.c.l.b16 %v2192
      %v2260 = vunpack.c.l.b16 %v2193
      %v2261 = vunpack.c.l.b16 %v2194
      %v2262 = vunpack.c.l.b16 %v2195
      %v2263 = vunpack.c.l.b16 %v2196
      %v2264 = vunpack.c.l.b16 %v2197
      %v2265 = vunpack.c.l.b16 %v2198
      %v2266 = vunpack.c.l.b16 %v2199
      %v2267 = vunpack.c.l.b16 %v2200
      %v2268 = vunpack.c.l.b16 %v2201
      %v2269 = vunpack.c.l.b16 %v2202
      %v2270 = vunpack.c.l.b16 %v2203
      %v2271 = vunpack.c.l.b16 %v2204
      %v2272 = vunpack.c.l.b16 %v2205
      %v2273 = vunpack.c.l.b16 %v2206
      %v2274 = vunpack.c.l.b16 %v2207
      %v2275 = vunpack.c.l.b16 %v2208
      %v2276 = vunpack.c.l.b16 %v2209
      %v2277 = vpack.c.b16 %v2260, %v2259
      %v2278 = vpack.c.b16 %v2262, %v2261
      %v2279 = vpack.c.b16 %v2264, %v2263
      %v2280 = vpack.c.b16 %v2266, %v2265
      %v2281 = vpack.c.b16 %v2268, %v2267
      %v2282 = vpack.c.b16 %v2270, %v2269
      %v2283 = vpack.c.b16 %v2272, %v2271
      %v2284 = vpack.c.b16 %v2274, %v2273
      %v2285 = vpack.c.b16 %v2276, %v2275
      %v2296 = vsel %vm1646, %v2218, 0
      %v2299 = vsel %vm1646, %v2220, 0
      %v2302 = vsel %vm1646, %v2222, 0
      %v2305 = vsel %vm1646, %v2224, 0
      %v2308 = vsel %vm1646, %v2226, 0
      %v2311 = vsel %vm1646, %v2228, 0
      %v2314 = vsel %vm1646, %v2230, 0
      %v2317 = vsel %vm1646, %v2232, 0
      %2319 = vmatprep.subr.bf16.mxu0 0
      %2320 = vmatpush1.bf16.msra.mxu0 %v2277
      %2321 = vmatprep.subr.bf16.mxu0 0
      %2322 = vmatpush1.bf16.msra.mxu0 %v2278
      %2323 = vmatprep.subr.bf16.mxu0 0
      %2324 = vmatpush1.bf16.msra.mxu0 %v2279
      %2325 = vmatprep.subr.bf16.mxu0 0
      %2326 = vmatpush1.bf16.msra.mxu0 %v2280
      %2327 = vmatprep.subr.bf16.mxu0 0
      %2328 = vmatpush1.bf16.msra.mxu0 %v2281
      %2329 = vmatprep.subr.bf16.mxu0 0
      %2330 = vmatpush1.bf16.msra.mxu0 %v2282
      %2331 = vmatprep.subr.bf16.mxu0 0
      %2332 = vmatpush1.bf16.msra.mxu0 %v2283
      %2333 = vmatprep.subr.bf16.mxu0 0
      %2334 = vmatpush1.bf16.msra.mxu0 %v2284
      %2335 = vmatprep.subr.bf16.mxu0 0
      %2336 = vmatpush1.bf16.msra.mxu0 %v2285
      %2337 = vmatprep.subr.bf16.mxu0 0
      %2338 = vmatpush1.bf16.msra.mxu0 0
      %2339 = vmatprep.subr.bf16.mxu0 0
      %2340 = vmatpush1.bf16.msra.mxu0 0
      %2341 = vmatprep.subr.bf16.mxu0 0
      %2342 = vmatpush1.bf16.msra.mxu0 0
      %2343 = vmatprep.subr.bf16.mxu0 0
      %2344 = vmatpush1.bf16.msra.mxu0 0
      %2345 = vmatprep.subr.bf16.mxu0 0
      %2346 = vmatpush1.bf16.msra.mxu0 0
      %2347 = vmatprep.subr.bf16.mxu0 0
      %2348 = vmatpush1.bf16.msra.mxu0 0
      %2349 = vmatprep.subr.bf16.mxu0 0
      %2350 = vmatpush1.bf16.msra.mxu0 0
      %2351 = vmatprep.mubr.bf16.mxu0 %v2296
      %2352 = vmatmul.mubr.bf16.gmra.mrb[0].mxu0 %v2217
      %v2353 = vpop.f32.mrb[0].mxu0
      %v2354 = vadd.f32 %v2215, %v2353
      %v2355 = vpop.f32.mrb[0].mxu0
      %v2356 = vpop.f32.mrb[0].mxu0
      %v2357 = vadd.f32 %v2215, %v2356
      %v2358 = vpop.f32.mrb[0].mxu0
      %2359 = vmatprep.mubr.bf16.mxu0 %v2299
      %2360 = vmatmul.mubr.bf16.gmra.mrb[0].mxu0 %v2219
      %v2361 = vpop.f32.mrb[0].mxu0
      %v2362 = vadd.f32 %v2215, %v2361
      %v2363 = vpop.f32.mrb[0].mxu0
      %v2364 = vpop.f32.mrb[0].mxu0
      %v2365 = vadd.f32 %v2215, %v2364
      %v2366 = vpop.f32.mrb[0].mxu0
      %2367 = vmatprep.mubr.bf16.mxu0 %v2302
      %2368 = vmatmul.mubr.bf16.gmra.mrb[0].mxu0 %v2221
      %v2369 = vpop.f32.mrb[0].mxu0
      %v2370 = vadd.f32 %v2215, %v2369
      %v2371 = vpop.f32.mrb[0].mxu0
      %v2372 = vpop.f32.mrb[0].mxu0
      %v2373 = vadd.f32 %v2215, %v2372
      %v2374 = vpop.f32.mrb[0].mxu0
      %2375 = vmatprep.mubr.bf16.mxu0 %v2305
      %2376 = vmatmul.mubr.bf16.gmra.mrb[0].mxu0 %v2223
      %v2377 = vpop.f32.mrb[0].mxu0
      %v2378 = vadd.f32 %v2215, %v2377
      %v2379 = vpop.f32.mrb[0].mxu0
      %v2380 = vpop.f32.mrb[0].mxu0
      %v2381 = vadd.f32 %v2215, %v2380
      %v2382 = vpop.f32.mrb[0].mxu0
      %2383 = vmatprep.mubr.bf16.mxu0 %v2308
      %2384 = vmatmul.mubr.bf16.gmra.mrb[0].mxu0 %v2225
      %v2385 = vpop.f32.mrb[0].mxu0
      %v2386 = vadd.f32 %v2215, %v2385
      %v2387 = vpop.f32.mrb[0].mxu0
      %v2388 = vpop.f32.mrb[0].mxu0
      %v2389 = vadd.f32 %v2215, %v2388
      %v2390 = vpop.f32.mrb[0].mxu0
      %2391 = vmatprep.mubr.bf16.mxu0 %v2311
      %2392 = vmatmul.mubr.bf16.gmra.mrb[0].mxu0 %v2227
      %v2393 = vpop.f32.mrb[0].mxu0
      %v2394 = vadd.f32 %v2215, %v2393
      %v2395 = vpop.f32.mrb[0].mxu0
      %v2396 = vpop.f32.mrb[0].mxu0
      %v2397 = vadd.f32 %v2215, %v2396
      %v2398 = vpop.f32.mrb[0].mxu0
      %2399 = vmatprep.mubr.bf16.mxu0 %v2314
      %2400 = vmatmul.mubr.bf16.gmra.mrb[0].mxu0 %v2229
      %v2401 = vpop.f32.mrb[0].mxu0
      %v2402 = vadd.f32 %v2215, %v2401
      %v2403 = vpop.f32.mrb[0].mxu0
      %v2404 = vpop.f32.mrb[0].mxu0
      %v2405 = vadd.f32 %v2215, %v2404
      %v2406 = vpop.f32.mrb[0].mxu0
      %2407 = vmatprep.mubr.bf16.mxu0 %v2317
      %2408 = vmatmul.mubr.bf16.gmra.mrb[0].mxu0 %v2231
      %v2409 = vpop.f32.mrb[0].mxu0
      %v2410 = vadd.f32 %v2215, %v2409
      %v2411 = vpop.f32.mrb[0].mxu0
      %v2412 = vpop.f32.mrb[0].mxu0
      %v2413 = vadd.f32 %v2215, %v2412
      %v2414 = vpop.f32.mrb[0].mxu0
      %2415 = vdwg.mxu0
      %v2416 = vmax.f32 %v2354, 0.0
      %v2417 = vmax.f32 %v2357, 0.0
      %v2418 = vmax.f32 %v2362, 0.0
      %v2419 = vmax.f32 %v2365, 0.0
      %v2420 = vmax.f32 %v2370, 0.0
      %v2421 = vmax.f32 %v2373, 0.0
      %v2422 = vmax.f32 %v2378, 0.0
      %v2423 = vmax.f32 %v2381, 0.0
      %v2424 = vmax.f32 %v2386, 0.0
      %v2425 = vmax.f32 %v2389, 0.0
      %v2426 = vmax.f32 %v2394, 0.0
      %v2427 = vmax.f32 %v2397, 0.0
      %v2428 = vmax.f32 %v2402, 0.0
      %v2429 = vmax.f32 %v2405, 0.0
      %v2430 = vmax.f32 %v2410, 0.0
      %v2431 = vmax.f32 %v2413, 0.0
      %2432 = vst.msk [vmem:[%s271] sm:$0xff] %vm309, %v2416
      %2433 = vst.msk [vmem:[%s271 + $0x8] sm:$0xff] %vm309, %v2417
      %2434 = vst.msk [vmem:[%s271 + $0x10] sm:$0xff] %vm309, %v2418
      %2435 = vst.msk [vmem:[%s271 + $0x18] sm:$0xff] %vm309, %v2419
      %2436 = vst.msk [vmem:[%s271 + $0x20] sm:$0xff] %vm309, %v2420
      %2437 = vst.msk [vmem:[%s271 + $0x28] sm:$0xff] %vm309, %v2421
      %2438 = vst.msk [vmem:[%s271 + $0x30] sm:$0xff] %vm309, %v2422
      %2439 = vst.msk [vmem:[%s271 + $0x38] sm:$0xff] %vm309, %v2423
      %2440 = vst.msk [vmem:[%s271 + $0x40] sm:$0xff] %vm309, %v2424
      %2441 = vst.msk [vmem:[%s271 + $0x48] sm:$0xff] %vm309, %v2425
      %2442 = vst.msk [vmem:[%s271 + $0x50] sm:$0xff] %vm309, %v2426
      %2443 = vst.msk [vmem:[%s271 + $0x58] sm:$0xff] %vm309, %v2427
      %2444 = vst.msk [vmem:[%s271 + $0x60] sm:$0xff] %vm309, %v2428
      %2445 = vst.msk [vmem:[%s271 + $0x68] sm:$0xff] %vm309, %v2429
      %2446 = vst.msk [vmem:[%s271 + $0x70] sm:$0xff] %vm309, %v2430
      %2447 = vst.msk [vmem:[%s271 + $0x78] sm:$0xff] %vm309, %v2431
      %p2448 = scmp.lt.s32.totalorder %s17, 1
      %s2449 = scalar_select %p2448, %s17, 1
      %s2450 = smul.addr %s2449, 16
      %s2451 = smul.addr %s2450, 8
      %s2452 = scalar_lea.vmem %s6, %s2451
      // Predicated region
      $region45: #{decoder_forward.1} parent=43 // pred_check
        %p2453 = pneg %p171
      $region46: #{decoder_forward.1} parent=43 // pred_check_branch
        %2455 = sbr.rel (%p2453) target = $region48
      $region47: #{decoder_forward.1} parent=43 // pred_region
        _
      $region48: #{decoder_forward.1} parent=43 // pred_fallthru
        _
    $region44: #{decoder_forward.1} parent=5 // pred_fallthru
      _
    %p2456 = scmp.le.s32.totalorder 2, %s12
    // Predicated region
    $region49: #{decoder_forward.1} parent=5 // pred_check
      %p2457 = pneg %p2456
    $region50: #{decoder_forward.1} parent=5 // pred_check_branch
      %2459 = sbr.rel (%p2457) target = $region52
    $region51: #{decoder_forward.1} parent=5 // pred_region
      %s2460 = ssub.s32 %s12, 2
      // Predicated region
      $region53: #{decoder_forward.1} parent=51 // pred_check
        %p2461 = pneg %p177
      $region54: #{decoder_forward.1} parent=51 // pred_check_branch
        %2463 = sbr.rel (%p2461) target = $region56
      $region55: #{decoder_forward.1} parent=51 // pred_region
        %p2464 = scmp.lt.s32.totalorder %s18, 1
        %s2465 = scalar_select %p2464, %s18, 1
        %s2466 = smul.addr %s2465, 16
        %s2467 = smul.addr %s2466, 8
        %s2468 = scalar_lea.vmem %s6, %s2467
      $region56: #{decoder_forward.1} parent=51 // pred_fallthru
        _
    $region52: #{decoder_forward.1} parent=5 // pred_fallthru
      _
  $region6: #{decoder_forward.1} parent=0 // loop_footer
    %s16 = sadd.s32 1, %s12
  $region7: #{decoder_forward.1} parent=0 // loop_footer_branch
    %11 = sbr.rel target = $region3
  $region8: #{decoder_forward.1} parent=0 // loop_exit
    _

</llo_original>
